<compile_context>
chip_gen: v7x
topology: tpu7x:2x2x1
jax: 0.10.0
libtpu: 0.0.40
codegen_flags: <defaults>
</compile_context>

<pallas_src>
import math

import jax
import jax.numpy as jnp
from jax.experimental import pallas as pl
from jax.experimental.pallas import tpu as pltpu


def _round_up(v, m):
    return ((v + m - 1) // m) * m


def _decoder_kernel(x_ref, w_ref, b_ref, o_ref):
    # x_ref: (TN, HW, C)   w_ref: (C, OUT_P)   b_ref: (1, OUT_P)   o_ref: (TN, OUT_P)
    # Global average pool: 1/HW is folded into w_ref, so a plain sum suffices.
    pooled = jnp.sum(x_ref[...], axis=1)                      # (TN, C) — VPU add chain
    acc = jnp.dot(pooled.astype(w_ref.dtype), w_ref[...],
                  preferred_element_type=jnp.float32)          # MXU, f32 accumulate
    o_ref[...] = acc + b_ref[...]


def prepare_decoder_params(weight, bias, hw, weight_dtype=jnp.float32):
    """One-time parameter prep (NOT in the per-call path).

    weight: (1000, 512) PyTorch nn.Linear layout; bias: (1000,)
    Returns w_prepped (512, OUT_P) in `weight_dtype` with 1/HW folded in,
            b_prepped (1, OUT_P) float32, where OUT_P = round_up(1000, 128).
    """
    out_dim, c = weight.shape
    out_p = _round_up(out_dim, 128)
    w = (weight.astype(jnp.float32) / float(hw)).T            # (C, OUT), fold pooling scale
    w = jnp.pad(w, ((0, 0), (0, out_p - out_dim)))            # lane-dense OUT
    b = jnp.pad(bias.astype(jnp.float32), (0, out_p - out_dim)).reshape(1, out_p)
    return w.astype(weight_dtype), b


def cornet_decoder(x_nchw, w_prepped, b_prepped, out_dim=1000):
    """x_nchw: (N, 512, H, W) float32 (PyTorch layout)
       w_prepped/b_prepped: from prepare_decoder_params
       returns (N, out_dim) float32"""
    n, c, h, w = x_nchw.shape
    assert c == 512, "CORnet_decoder expects 512 input channels"
    hw = h * w
    c_w, out_p = w_prepped.shape
    assert c_w == c

    # NHWC: C on the lane axis, HW on sublanes.
    x = jnp.transpose(x_nchw, (0, 2, 3, 1)).reshape(n, hw, c).astype(jnp.float32)

    # Batch tile: multiple of 8, <=128 rows, and small enough that a double-buffered
    # x tile stays ~<=24 MiB (portable down to v7x's 64 MiB VMEM / v5e defaults).
    rows_budget = max(8, (12 * 1024 * 1024) // (hw * c * 4))
    tn = min(128, rows_budget, _round_up(n, 8))
    tn = max(8, (tn // 8) * 8)
    grid = (pl.cdiv(n, tn),)

    out_padded = pl.pallas_call(
        _decoder_kernel,
        out_shape=jax.ShapeDtypeStruct((n, out_p), jnp.float32),
        grid=grid,
        in_specs=[
            pl.BlockSpec((tn, hw, c), lambda i: (i, 0, 0)),     # x tile per batch block
            pl.BlockSpec((c, out_p), lambda i: (0, 0)),         # resident weight
            pl.BlockSpec((1, out_p), lambda i: (0, 0)),         # resident bias
        ],
        out_specs=pl.BlockSpec((tn, out_p), lambda i: (i, 0)),
        compiler_params=pltpu.CompilerParams(
            dimension_semantics=("parallel",),
            vmem_limit_bytes=48 * 1024 * 1024,
        ),
    )(x, w_prepped, b_prepped)

    return out_padded[:, :out_dim]


def init_params(key, c=512, out_dim=1000):
    """Deterministic nn.Linear(512, 1000)-style init (uniform(-1/sqrt(512), 1/sqrt(512)))."""
    kw, kb = jax.random.split(key)
    bound = 1.0 / math.sqrt(c)
    weight = jax.random.uniform(kw, (out_dim, c), jnp.float32, -bound, bound)
    bias = jax.random.uniform(kb, (out_dim,), jnp.float32, -bound, bound)
    return weight, bias


if __name__ == "__main__":
    key = jax.random.PRNGKey(0)
    kx, kp = jax.random.split(key)

    # Small shapes consistent with the module: batch=2, channels=512 (required by
    # the Linear layer), spatial=4x4.
    n, c, h, w = 2, 512, 4, 4
    x = jax.random.normal(kx, (n, c, h, w), jnp.float32)
    weight, bias = init_params(kp)

    # Plain-JAX reference of the module's forward semantics.
    ref = x.mean(axis=(2, 3)) @ weight.T + bias

    # f32 weight path (exact nn.Linear semantics).
    w32, b32 = prepare_decoder_params(weight, bias, h * w, jnp.float32)
    out32 = jax.block_until_ready(cornet_decoder(x, w32, b32, out_dim=1000))
    assert out32.shape == (n, 1000)
    assert jnp.allclose(out32, ref, atol=1e-4, rtol=1e-4)

    # bf16 weight path (recommended on v6e/v7x: halves resident-weight HBM traffic,
    # native MXU bf16, f32 accumulation).
    wbf, bbf = prepare_decoder_params(weight, bias, h * w, jnp.bfloat16)
    outbf = jax.block_until_ready(cornet_decoder(x, wbf, bbf, out_dim=1000))
    assert outbf.shape == (n, 1000)
    assert jnp.allclose(outbf, ref, atol=2e-2, rtol=2e-2)

    print("KERNEL_OK")
</pallas_src>

<mosaic_0001>
module attributes {stable_mosaic.version = 11 : i64} {
  func.func @_decoder_kernel(%arg0: i32, %arg1: memref<8x16x512xf32, #tpu.memory_space<vmem>>, %arg2: memref<512x1024xf32, #tpu.memory_space<vmem>>, %arg3: memref<1x1024xf32, #tpu.memory_space<vmem>>, %arg4: memref<8x1024xf32, #tpu.memory_space<vmem>>) attributes {dimension_semantics = [#tpu.dimension_semantics<parallel>], iteration_bounds = array<i64: 1>, scalar_prefetch = 0 : i64, scratch_operands = 0 : i64, tpu.core_type = #tpu.core_type<tc>, window_params = [{transform_indices = @transform_0, window_bounds = array<i64: 8, 16, 512>}, {pipeline_mode = #tpu.pipeline_mode<synchronous>, transform_indices = @transform_1, window_bounds = array<i64: 512, 1024>}, {pipeline_mode = #tpu.pipeline_mode<synchronous>, transform_indices = @transform_2, window_bounds = array<i64: 1, 1024>}, {transform_indices = @transform_3, window_bounds = array<i64: 8, 1024>}]} {
    %c0 = arith.constant 0 : index
    %c0_0 = arith.constant 0 : index
    %c0_1 = arith.constant 0 : index
    %0 = vector.load %arg1[%c0, %c0_0, %c0_1] : memref<8x16x512xf32, #tpu.memory_space<vmem>>, vector<8x16x512xf32>
    %cst = arith.constant dense<0.000000e+00> : vector<8x512xf32>
    %1 = vector.multi_reduction <add>, %0, %cst [1] : vector<8x16x512xf32> to vector<8x512xf32>
    %c0_2 = arith.constant 0 : index
    %c0_3 = arith.constant 0 : index
    %2 = vector.load %arg2[%c0_2, %c0_3] : memref<512x1024xf32, #tpu.memory_space<vmem>>, vector<512x1024xf32>
    %cst_4 = arith.constant dense<0.000000e+00> : vector<8x1024xf32>
    %3 = tpu.matmul %1, %2, %cst_4 {dimension_numbers = #tpu.dot_dimension_numbers<[1], [0], [0], [1], [0, 0, 1, 1], [], []>} : vector<8x512xf32>, vector<512x1024xf32>, vector<8x1024xf32> -> vector<8x1024xf32>
    %c0_5 = arith.constant 0 : index
    %c0_6 = arith.constant 0 : index
    %4 = vector.load %arg3[%c0_5, %c0_6] : memref<1x1024xf32, #tpu.memory_space<vmem>>, vector<1x1024xf32>
    %5 = vector.broadcast %4 : vector<1x1024xf32> to vector<8x1024xf32>
    %6 = arith.addf %3, %5 : vector<8x1024xf32>
    %c0_7 = arith.constant 0 : index
    %c0_8 = arith.constant 0 : index
    %7 = vector.load %arg4[%c0_7, %c0_8] : memref<8x1024xf32, #tpu.memory_space<vmem>>, vector<8x1024xf32>
    tpu.vector_store %arg4[%c0_7, %c0_8], %6 {strides = array<i32>} : memref<8x1024xf32, #tpu.memory_space<vmem>>, vector<8x1024xf32>,
    return
  }
  func.func @transform_0(%arg0: i32) -> (i32, i32, i32) {
    %c0_i32 = arith.constant 0 : i32
    %c0_i32_0 = arith.constant 0 : i32
    %c0_i32_1 = arith.constant 0 : i32
    return %arg0, %c0_i32, %c0_i32_0 : i32, i32, i32
  }
  func.func @transform_1(%arg0: i32) -> (i32, i32) {
    %c0_i32 = arith.constant 0 : i32
    %c0_i32_0 = arith.constant 0 : i32
    %c0_i32_1 = arith.constant 0 : i32
    return %c0_i32, %c0_i32_0 : i32, i32
  }
  func.func @transform_2(%arg0: i32) -> (i32, i32) {
    %c0_i32 = arith.constant 0 : i32
    %c0_i32_0 = arith.constant 0 : i32
    %c0_i32_1 = arith.constant 0 : i32
    return %c0_i32, %c0_i32_0 : i32, i32
  }
  func.func @transform_3(%arg0: i32) -> (i32, i32) {
    %c0_i32 = arith.constant 0 : i32
    %c0_i32_0 = arith.constant 0 : i32
    return %arg0, %c0_i32 : i32, i32
  }
}

</mosaic_0001>

<llo_original>
// kernel: tpu_custom_call.1
$region0: #{tpu_custom_call.1}
  #allocation0 [shape = 'u32[]', space=smem, size = 0x4, offset = 0x4, fixed_abs, tag = 'smem constant byte address 0x4 - core index']
  #allocation1 [shape = 'u32[144,128]{1,0:T(1,128)}', space=vmem, size = 0x12000, scoped, tag = 'internal scratch']
  %s0 = inlined_call_operand.hbm [shape: f32[2,16,512], index: 0, kind: input, shape index: {}]
  %s1 = inlined_call_operand.hbm [shape: f32[512,1024], index: 1, kind: input, shape index: {}]
  %s2 = inlined_call_operand.hbm [shape: f32[1,1024], index: 2, kind: input, shape index: {}]
  %s3 = inlined_call_operand.hbm [shape: f32[2,1024], index: 3, kind: output, shape index: {}]
  %s4 = sld [smem:[#allocation0]]
  $region34: #{tpu_custom_call.1} parent=0
    _
  %s6 = ssub.s32 1, %s4
  %s7 = scalar_select 0, %s6, %s4
  $region1: #{tpu_custom_call.1} parent=0
    #allocation2 [shape = 'u8[262144]{0}', space=vmem, size = 0x40000, scoped, tag = 'input window, operand 0, single buffered']
    #allocation3 [shape = 's32[1]{0}', space=sflag, size = 0x4, scoped, tag = 'scoped memory for tpu_custom_call.1']
    #allocation4 [shape = 's32[1]{0}', space=sflag, size = 0x4, scoped, tag = 'scoped memory for tpu_custom_call.1']
    #allocation5 [shape = 'u8[2097152]{0}', space=vmem, size = 0x200000, scoped, tag = 'input window, operand 1, single buffered']
    #allocation6 [shape = 's32[1]{0}', space=sflag, size = 0x4, scoped, tag = 'scoped memory for tpu_custom_call.1']
    #allocation7 [shape = 'u8[4096]{0}', space=vmem, size = 0x1000, scoped, tag = 'input window, operand 2, single buffered']
    #allocation8 [shape = 'u8[32768]{0}', space=vmem, size = 0x8000, scoped, tag = 'output window, operand 0, single buffered']
    %8 = vsyncpa [#allocation3], 0
    %9 = vsyncpa [#allocation6], 0
    %10 = vsyncpa [#allocation4], 0
    // Predicated region
    $region2: #{tpu_custom_call.1} parent=1 // pred_check
      _
    $region3: #{tpu_custom_call.1} parent=1 // pred_check_branch
      %12 = sbr.rel (0) target = $region5
    $region4: #{tpu_custom_call.1} parent=1 // pred_region
      %s14 = ssub.s32 8192, 2048
      %15 = vsyncadd [#allocation3], %s14
      %s16 = sshll.u32 [#allocation2], 4
      %s17 = int_to_ptr.vmem [resolvable:$true] %s16
      %22 = dma.hbm_to_vmem [thread:$0]  %s0, 2048, %s17, [#allocation3], 512, 512, 32
    $region5: #{tpu_custom_call.1} parent=1 // pred_fallthru
      _
    // Predicated region
    $region6: #{tpu_custom_call.1} parent=1 // pred_check
      _
    $region7: #{tpu_custom_call.1} parent=1 // pred_check_branch
      %24 = sbr.rel (0) target = $region9
    $region8: #{tpu_custom_call.1} parent=1 // pred_region
      %s26 = ssub.s32 65536, 65536
      %27 = vsyncadd [#allocation6], %s26
      %s28 = sshll.u32 [#allocation5], 4
      %s29 = int_to_ptr.vmem [resolvable:$true] %s28
      %34 = dma.hbm_to_vmem [thread:$0]  %s1, 65536, %s29, [#allocation6], 1024, 1024, 64
    $region9: #{tpu_custom_call.1} parent=1 // pred_fallthru
      _
    // Predicated region
    $region10: #{tpu_custom_call.1} parent=1 // pred_check
      _
    $region11: #{tpu_custom_call.1} parent=1 // pred_check_branch
      %36 = sbr.rel (0) target = $region13
    $region12: #{tpu_custom_call.1} parent=1 // pred_region
      %s38 = ssub.s32 128, 128
      %39 = vsyncadd [#allocation6], %s38
      %s41 = sshll.u32 [#allocation7], 4
      %s42 = int_to_ptr.vmem [resolvable:$true] %s41
      %44 = dma.hbm_to_vmem [thread:$0]  %s2, 128, %s42, [#allocation6]
    $region13: #{tpu_custom_call.1} parent=1 // pred_fallthru
      _
    // Predicated region
    $region14: #{tpu_custom_call.1} parent=1 // pred_check
      _
    $region15: #{tpu_custom_call.1} parent=1 // pred_check_branch
      %46 = sbr.rel (0) target = $region17
    $region16: #{tpu_custom_call.1} parent=1 // pred_region
      %47 = dma.done [#allocation3], 8192
    $region17: #{tpu_custom_call.1} parent=1 // pred_fallthru
      _
    // Predicated region
    $region18: #{tpu_custom_call.1} parent=1 // pred_check
      _
    $region19: #{tpu_custom_call.1} parent=1 // pred_check_branch
      %49 = sbr.rel (0) target = $region21
    $region20: #{tpu_custom_call.1} parent=1 // pred_region
      %50 = dma.done [#allocation6], 65536
    $region21: #{tpu_custom_call.1} parent=1 // pred_fallthru
      _
    // Predicated region
    $region22: #{tpu_custom_call.1} parent=1 // pred_check
      _
    $region23: #{tpu_custom_call.1} parent=1 // pred_check_branch
      %52 = sbr.rel (0) target = $region25
    $region24: #{tpu_custom_call.1} parent=1 // pred_region
      %53 = dma.done [#allocation6], 128
    $region25: #{tpu_custom_call.1} parent=1 // pred_fallthru
      _
    %v54 = vld [vmem:[#allocation2] sm:$0xff]
    %v55 = vld [vmem:[#allocation2 + $0x8] sm:$0xff]
    %v56 = vld [vmem:[#allocation2 + $0x10] sm:$0xff]
    %v57 = vld [vmem:[#allocation2 + $0x18] sm:$0xff]
    %v58 = vld [vmem:[#allocation2 + $0x20] sm:$0xff]
    %v59 = vld [vmem:[#allocation2 + $0x28] sm:$0xff]
    %v60 = vld [vmem:[#allocation2 + $0x30] sm:$0xff]
    %v61 = vld [vmem:[#allocation2 + $0x38] sm:$0xff]
    %v62 = vld [vmem:[#allocation2 + $0x40] sm:$0xff]
    %v63 = vld [vmem:[#allocation2 + $0x48] sm:$0xff]
    %v64 = vld [vmem:[#allocation2 + $0x50] sm:$0xff]
    %v65 = vld [vmem:[#allocation2 + $0x58] sm:$0xff]
    %v66 = vld [vmem:[#allocation2 + $0x60] sm:$0xff]
    %v67 = vld [vmem:[#allocation2 + $0x68] sm:$0xff]
    %v68 = vld [vmem:[#allocation2 + $0x70] sm:$0xff]
    %v69 = vld [vmem:[#allocation2 + $0x78] sm:$0xff]
    %v70 = vld [vmem:[#allocation2 + $0x80] sm:$0xff]
    %v71 = vld [vmem:[#allocation2 + $0x88] sm:$0xff]
    %v72 = vld [vmem:[#allocation2 + $0x90] sm:$0xff]
    %v73 = vld [vmem:[#allocation2 + $0x98] sm:$0xff]
    %v74 = vld [vmem:[#allocation2 + $0xa0] sm:$0xff]
    %v75 = vld [vmem:[#allocation2 + $0xa8] sm:$0xff]
    %v76 = vld [vmem:[#allocation2 + $0xb0] sm:$0xff]
    %v77 = vld [vmem:[#allocation2 + $0xb8] sm:$0xff]
    %v78 = vld [vmem:[#allocation2 + $0xc0] sm:$0xff]
    %v79 = vld [vmem:[#allocation2 + $0xc8] sm:$0xff]
    %v80 = vld [vmem:[#allocation2 + $0xd0] sm:$0xff]
    %v81 = vld [vmem:[#allocation2 + $0xd8] sm:$0xff]
    %v82 = vld [vmem:[#allocation2 + $0xe0] sm:$0xff]
    %v83 = vld [vmem:[#allocation2 + $0xe8] sm:$0xff]
    %v84 = vld [vmem:[#allocation2 + $0xf0] sm:$0xff]
    %v85 = vld [vmem:[#allocation2 + $0xf8] sm:$0xff]
    %v86 = vld [vmem:[#allocation2 + $0x100] sm:$0xff]
    %v87 = vld [vmem:[#allocation2 + $0x108] sm:$0xff]
    %v88 = vld [vmem:[#allocation2 + $0x110] sm:$0xff]
    %v89 = vld [vmem:[#allocation2 + $0x118] sm:$0xff]
    %v90 = vld [vmem:[#allocation2 + $0x120] sm:$0xff]
    %v91 = vld [vmem:[#allocation2 + $0x128] sm:$0xff]
    %v92 = vld [vmem:[#allocation2 + $0x130] sm:$0xff]
    %v93 = vld [vmem:[#allocation2 + $0x138] sm:$0xff]
    %v94 = vld [vmem:[#allocation2 + $0x140] sm:$0xff]
    %v95 = vld [vmem:[#allocation2 + $0x148] sm:$0xff]
    %v96 = vld [vmem:[#allocation2 + $0x150] sm:$0xff]
    %v97 = vld [vmem:[#allocation2 + $0x158] sm:$0xff]
    %v98 = vld [vmem:[#allocation2 + $0x160] sm:$0xff]
    %v99 = vld [vmem:[#allocation2 + $0x168] sm:$0xff]
    %v100 = vld [vmem:[#allocation2 + $0x170] sm:$0xff]
    %v101 = vld [vmem:[#allocation2 + $0x178] sm:$0xff]
    %v102 = vld [vmem:[#allocation2 + $0x180] sm:$0xff]
    %v103 = vld [vmem:[#allocation2 + $0x188] sm:$0xff]
    %v104 = vld [vmem:[#allocation2 + $0x190] sm:$0xff]
    %v105 = vld [vmem:[#allocation2 + $0x198] sm:$0xff]
    %v106 = vld [vmem:[#allocation2 + $0x1a0] sm:$0xff]
    %v107 = vld [vmem:[#allocation2 + $0x1a8] sm:$0xff]
    %v108 = vld [vmem:[#allocation2 + $0x1b0] sm:$0xff]
    %v109 = vld [vmem:[#allocation2 + $0x1b8] sm:$0xff]
    %v110 = vld [vmem:[#allocation2 + $0x1c0] sm:$0xff]
    %v111 = vld [vmem:[#allocation2 + $0x1c8] sm:$0xff]
    %v112 = vld [vmem:[#allocation2 + $0x1d0] sm:$0xff]
    %v113 = vld [vmem:[#allocation2 + $0x1d8] sm:$0xff]
    %v114 = vld [vmem:[#allocation2 + $0x1e0] sm:$0xff]
    %v115 = vld [vmem:[#allocation2 + $0x1e8] sm:$0xff]
    %v116 = vld [vmem:[#allocation2 + $0x1f0] sm:$0xff]
    %v117 = vld [vmem:[#allocation2 + $0x1f8] sm:$0xff]
    %v118 = vadd.f32 %v54, %v58
    %v119 = vrot.slane %v118, 4
    %v120 = vadd.f32 %v118, %v119
    %v121 = vrot.slane %v120, 2
    %v122 = vadd.f32 %v120, %v121
    %v123 = vrot.slane %v122, 1
    %v124 = vadd.f32 %v122, %v123
    %v125 = vadd.f32 %v55, %v59
    %v126 = vrot.slane %v125, 4
    %v127 = vadd.f32 %v125, %v126
    %v128 = vrot.slane %v127, 2
    %v129 = vadd.f32 %v127, %v128
    %v130 = vrot.slane %v129, 1
    %v131 = vadd.f32 %v129, %v130
    %v132 = vadd.f32 %v56, %v60
    %v133 = vrot.slane %v132, 4
    %v134 = vadd.f32 %v132, %v133
    %v135 = vrot.slane %v134, 2
    %v136 = vadd.f32 %v134, %v135
    %v137 = vrot.slane %v136, 1
    %v138 = vadd.f32 %v136, %v137
    %v139 = vadd.f32 %v57, %v61
    %v140 = vrot.slane %v139, 4
    %v141 = vadd.f32 %v139, %v140
    %v142 = vrot.slane %v141, 2
    %v143 = vadd.f32 %v141, %v142
    %v144 = vrot.slane %v143, 1
    %v145 = vadd.f32 %v143, %v144
    %v146 = vadd.f32 %v62, %v66
    %v147 = vrot.slane %v146, 4
    %v148 = vadd.f32 %v146, %v147
    %v149 = vrot.slane %v148, 2
    %v150 = vadd.f32 %v148, %v149
    %v151 = vrot.slane %v150, 1
    %v152 = vadd.f32 %v150, %v151
    %v153 = vadd.f32 %v63, %v67
    %v154 = vrot.slane %v153, 4
    %v155 = vadd.f32 %v153, %v154
    %v156 = vrot.slane %v155, 2
    %v157 = vadd.f32 %v155, %v156
    %v158 = vrot.slane %v157, 1
    %v159 = vadd.f32 %v157, %v158
    %v160 = vadd.f32 %v64, %v68
    %v161 = vrot.slane %v160, 4
    %v162 = vadd.f32 %v160, %v161
    %v163 = vrot.slane %v162, 2
    %v164 = vadd.f32 %v162, %v163
    %v165 = vrot.slane %v164, 1
    %v166 = vadd.f32 %v164, %v165
    %v167 = vadd.f32 %v65, %v69
    %v168 = vrot.slane %v167, 4
    %v169 = vadd.f32 %v167, %v168
    %v170 = vrot.slane %v169, 2
    %v171 = vadd.f32 %v169, %v170
    %v172 = vrot.slane %v171, 1
    %v173 = vadd.f32 %v171, %v172
    %v174 = vadd.f32 %v70, %v74
    %v175 = vrot.slane %v174, 4
    %v176 = vadd.f32 %v174, %v175
    %v177 = vrot.slane %v176, 2
    %v178 = vadd.f32 %v176, %v177
    %v179 = vrot.slane %v178, 1
    %v180 = vadd.f32 %v178, %v179
    %v181 = vadd.f32 %v71, %v75
    %v182 = vrot.slane %v181, 4
    %v183 = vadd.f32 %v181, %v182
    %v184 = vrot.slane %v183, 2
    %v185 = vadd.f32 %v183, %v184
    %v186 = vrot.slane %v185, 1
    %v187 = vadd.f32 %v185, %v186
    %v188 = vadd.f32 %v72, %v76
    %v189 = vrot.slane %v188, 4
    %v190 = vadd.f32 %v188, %v189
    %v191 = vrot.slane %v190, 2
    %v192 = vadd.f32 %v190, %v191
    %v193 = vrot.slane %v192, 1
    %v194 = vadd.f32 %v192, %v193
    %v195 = vadd.f32 %v73, %v77
    %v196 = vrot.slane %v195, 4
    %v197 = vadd.f32 %v195, %v196
    %v198 = vrot.slane %v197, 2
    %v199 = vadd.f32 %v197, %v198
    %v200 = vrot.slane %v199, 1
    %v201 = vadd.f32 %v199, %v200
    %v202 = vadd.f32 %v78, %v82
    %v203 = vrot.slane %v202, 4
    %v204 = vadd.f32 %v202, %v203
    %v205 = vrot.slane %v204, 2
    %v206 = vadd.f32 %v204, %v205
    %v207 = vrot.slane %v206, 1
    %v208 = vadd.f32 %v206, %v207
    %v209 = vadd.f32 %v79, %v83
    %v210 = vrot.slane %v209, 4
    %v211 = vadd.f32 %v209, %v210
    %v212 = vrot.slane %v211, 2
    %v213 = vadd.f32 %v211, %v212
    %v214 = vrot.slane %v213, 1
    %v215 = vadd.f32 %v213, %v214
    %v216 = vadd.f32 %v80, %v84
    %v217 = vrot.slane %v216, 4
    %v218 = vadd.f32 %v216, %v217
    %v219 = vrot.slane %v218, 2
    %v220 = vadd.f32 %v218, %v219
    %v221 = vrot.slane %v220, 1
    %v222 = vadd.f32 %v220, %v221
    %v223 = vadd.f32 %v81, %v85
    %v224 = vrot.slane %v223, 4
    %v225 = vadd.f32 %v223, %v224
    %v226 = vrot.slane %v225, 2
    %v227 = vadd.f32 %v225, %v226
    %v228 = vrot.slane %v227, 1
    %v229 = vadd.f32 %v227, %v228
    %v230 = vadd.f32 %v86, %v90
    %v231 = vrot.slane %v230, 4
    %v232 = vadd.f32 %v230, %v231
    %v233 = vrot.slane %v232, 2
    %v234 = vadd.f32 %v232, %v233
    %v235 = vrot.slane %v234, 1
    %v236 = vadd.f32 %v234, %v235
    %v237 = vadd.f32 %v87, %v91
    %v238 = vrot.slane %v237, 4
    %v239 = vadd.f32 %v237, %v238
    %v240 = vrot.slane %v239, 2
    %v241 = vadd.f32 %v239, %v240
    %v242 = vrot.slane %v241, 1
    %v243 = vadd.f32 %v241, %v242
    %v244 = vadd.f32 %v88, %v92
    %v245 = vrot.slane %v244, 4
    %v246 = vadd.f32 %v244, %v245
    %v247 = vrot.slane %v246, 2
    %v248 = vadd.f32 %v246, %v247
    %v249 = vrot.slane %v248, 1
    %v250 = vadd.f32 %v248, %v249
    %v251 = vadd.f32 %v89, %v93
    %v252 = vrot.slane %v251, 4
    %v253 = vadd.f32 %v251, %v252
    %v254 = vrot.slane %v253, 2
    %v255 = vadd.f32 %v253, %v254
    %v256 = vrot.slane %v255, 1
    %v257 = vadd.f32 %v255, %v256
    %v258 = vadd.f32 %v94, %v98
    %v259 = vrot.slane %v258, 4
    %v260 = vadd.f32 %v258, %v259
    %v261 = vrot.slane %v260, 2
    %v262 = vadd.f32 %v260, %v261
    %v263 = vrot.slane %v262, 1
    %v264 = vadd.f32 %v262, %v263
    %v265 = vadd.f32 %v95, %v99
    %v266 = vrot.slane %v265, 4
    %v267 = vadd.f32 %v265, %v266
    %v268 = vrot.slane %v267, 2
    %v269 = vadd.f32 %v267, %v268
    %v270 = vrot.slane %v269, 1
    %v271 = vadd.f32 %v269, %v270
    %v272 = vadd.f32 %v96, %v100
    %v273 = vrot.slane %v272, 4
    %v274 = vadd.f32 %v272, %v273
    %v275 = vrot.slane %v274, 2
    %v276 = vadd.f32 %v274, %v275
    %v277 = vrot.slane %v276, 1
    %v278 = vadd.f32 %v276, %v277
    %v279 = vadd.f32 %v97, %v101
    %v280 = vrot.slane %v279, 4
    %v281 = vadd.f32 %v279, %v280
    %v282 = vrot.slane %v281, 2
    %v283 = vadd.f32 %v281, %v282
    %v284 = vrot.slane %v283, 1
    %v285 = vadd.f32 %v283, %v284
    %v286 = vadd.f32 %v102, %v106
    %v287 = vrot.slane %v286, 4
    %v288 = vadd.f32 %v286, %v287
    %v289 = vrot.slane %v288, 2
    %v290 = vadd.f32 %v288, %v289
    %v291 = vrot.slane %v290, 1
    %v292 = vadd.f32 %v290, %v291
    %v293 = vadd.f32 %v103, %v107
    %v294 = vrot.slane %v293, 4
    %v295 = vadd.f32 %v293, %v294
    %v296 = vrot.slane %v295, 2
    %v297 = vadd.f32 %v295, %v296
    %v298 = vrot.slane %v297, 1
    %v299 = vadd.f32 %v297, %v298
    %v300 = vadd.f32 %v104, %v108
    %v301 = vrot.slane %v300, 4
    %v302 = vadd.f32 %v300, %v301
    %v303 = vrot.slane %v302, 2
    %v304 = vadd.f32 %v302, %v303
    %v305 = vrot.slane %v304, 1
    %v306 = vadd.f32 %v304, %v305
    %v307 = vadd.f32 %v105, %v109
    %v308 = vrot.slane %v307, 4
    %v309 = vadd.f32 %v307, %v308
    %v310 = vrot.slane %v309, 2
    %v311 = vadd.f32 %v309, %v310
    %v312 = vrot.slane %v311, 1
    %v313 = vadd.f32 %v311, %v312
    %v314 = vadd.f32 %v110, %v114
    %v315 = vrot.slane %v314, 4
    %v316 = vadd.f32 %v314, %v315
    %v317 = vrot.slane %v316, 2
    %v318 = vadd.f32 %v316, %v317
    %v319 = vrot.slane %v318, 1
    %v320 = vadd.f32 %v318, %v319
    %v321 = vadd.f32 %v111, %v115
    %v322 = vrot.slane %v321, 4
    %v323 = vadd.f32 %v321, %v322
    %v324 = vrot.slane %v323, 2
    %v325 = vadd.f32 %v323, %v324
    %v326 = vrot.slane %v325, 1
    %v327 = vadd.f32 %v325, %v326
    %v328 = vadd.f32 %v112, %v116
    %v329 = vrot.slane %v328, 4
    %v330 = vadd.f32 %v328, %v329
    %v331 = vrot.slane %v330, 2
    %v332 = vadd.f32 %v330, %v331
    %v333 = vrot.slane %v332, 1
    %v334 = vadd.f32 %v332, %v333
    %v335 = vadd.f32 %v113, %v117
    %v336 = vrot.slane %v335, 4
    %v337 = vadd.f32 %v335, %v336
    %v338 = vrot.slane %v337, 2
    %v339 = vadd.f32 %v337, %v338
    %v340 = vrot.slane %v339, 1
    %v341 = vadd.f32 %v339, %v340
    %v342 = vld [vmem:[#allocation5] sm:$0xff]
    %v343 = vld [vmem:[#allocation5 + $0x8] sm:$0xff]
    %v344 = vld [vmem:[#allocation5 + $0x10] sm:$0xff]
    %v345 = vld [vmem:[#allocation5 + $0x18] sm:$0xff]
    %v346 = vld [vmem:[#allocation5 + $0x20] sm:$0xff]
    %v347 = vld [vmem:[#allocation5 + $0x28] sm:$0xff]
    %v348 = vld [vmem:[#allocation5 + $0x30] sm:$0xff]
    %v349 = vld [vmem:[#allocation5 + $0x38] sm:$0xff]
    %v350 = vld [vmem:[#allocation5 + $0x40] sm:$0xff]
    %v351 = vld [vmem:[#allocation5 + $0x48] sm:$0xff]
    %v352 = vld [vmem:[#allocation5 + $0x50] sm:$0xff]
    %v353 = vld [vmem:[#allocation5 + $0x58] sm:$0xff]
    %v354 = vld [vmem:[#allocation5 + $0x60] sm:$0xff]
    %v355 = vld [vmem:[#allocation5 + $0x68] sm:$0xff]
    %v356 = vld [vmem:[#allocation5 + $0x70] sm:$0xff]
    %v357 = vld [vmem:[#allocation5 + $0x78] sm:$0xff]
    %v358 = vld [vmem:[#allocation5 + $0x80] sm:$0xff]
    %v359 = vld [vmem:[#allocation5 + $0x88] sm:$0xff]
    %v360 = vld [vmem:[#allocation5 + $0x90] sm:$0xff]
    %v361 = vld [vmem:[#allocation5 + $0x98] sm:$0xff]
    %v362 = vld [vmem:[#allocation5 + $0xa0] sm:$0xff]
    %v363 = vld [vmem:[#allocation5 + $0xa8] sm:$0xff]
    %v364 = vld [vmem:[#allocation5 + $0xb0] sm:$0xff]
    %v365 = vld [vmem:[#allocation5 + $0xb8] sm:$0xff]
    %v366 = vld [vmem:[#allocation5 + $0xc0] sm:$0xff]
    %v367 = vld [vmem:[#allocation5 + $0xc8] sm:$0xff]
    %v368 = vld [vmem:[#allocation5 + $0xd0] sm:$0xff]
    %v369 = vld [vmem:[#allocation5 + $0xd8] sm:$0xff]
    %v370 = vld [vmem:[#allocation5 + $0xe0] sm:$0xff]
    %v371 = vld [vmem:[#allocation5 + $0xe8] sm:$0xff]
    %v372 = vld [vmem:[#allocation5 + $0xf0] sm:$0xff]
    %v373 = vld [vmem:[#allocation5 + $0xf8] sm:$0xff]
    %v374 = vld [vmem:[#allocation5 + $0x100] sm:$0xff]
    %v375 = vld [vmem:[#allocation5 + $0x108] sm:$0xff]
    %v376 = vld [vmem:[#allocation5 + $0x110] sm:$0xff]
    %v377 = vld [vmem:[#allocation5 + $0x118] sm:$0xff]
    %v378 = vld [vmem:[#allocation5 + $0x120] sm:$0xff]
    %v379 = vld [vmem:[#allocation5 + $0x128] sm:$0xff]
    %v380 = vld [vmem:[#allocation5 + $0x130] sm:$0xff]
    %v381 = vld [vmem:[#allocation5 + $0x138] sm:$0xff]
    %v382 = vld [vmem:[#allocation5 + $0x140] sm:$0xff]
    %v383 = vld [vmem:[#allocation5 + $0x148] sm:$0xff]
    %v384 = vld [vmem:[#allocation5 + $0x150] sm:$0xff]
    %v385 = vld [vmem:[#allocation5 + $0x158] sm:$0xff]
    %v386 = vld [vmem:[#allocation5 + $0x160] sm:$0xff]
    %v387 = vld [vmem:[#allocation5 + $0x168] sm:$0xff]
    %v388 = vld [vmem:[#allocation5 + $0x170] sm:$0xff]
    %v389 = vld [vmem:[#allocation5 + $0x178] sm:$0xff]
    %v390 = vld [vmem:[#allocation5 + $0x180] sm:$0xff]
    %v391 = vld [vmem:[#allocation5 + $0x188] sm:$0xff]
    %v392 = vld [vmem:[#allocation5 + $0x190] sm:$0xff]
    %v393 = vld [vmem:[#allocation5 + $0x198] sm:$0xff]
    %v394 = vld [vmem:[#allocation5 + $0x1a0] sm:$0xff]
    %v395 = vld [vmem:[#allocation5 + $0x1a8] sm:$0xff]
    %v396 = vld [vmem:[#allocation5 + $0x1b0] sm:$0xff]
    %v397 = vld [vmem:[#allocation5 + $0x1b8] sm:$0xff]
    %v398 = vld [vmem:[#allocation5 + $0x1c0] sm:$0xff]
    %v399 = vld [vmem:[#allocation5 + $0x1c8] sm:$0xff]
    %v400 = vld [vmem:[#allocation5 + $0x1d0] sm:$0xff]
    %v401 = vld [vmem:[#allocation5 + $0x1d8] sm:$0xff]
    %v402 = vld [vmem:[#allocation5 + $0x1e0] sm:$0xff]
    %v403 = vld [vmem:[#allocation5 + $0x1e8] sm:$0xff]
    %v404 = vld [vmem:[#allocation5 + $0x1f0] sm:$0xff]
    %v405 = vld [vmem:[#allocation5 + $0x1f8] sm:$0xff]
    %v406 = vld [vmem:[#allocation5 + $0x200] sm:$0xff]
    %v407 = vld [vmem:[#allocation5 + $0x208] sm:$0xff]
    %v408 = vld [vmem:[#allocation5 + $0x210] sm:$0xff]
    %v409 = vld [vmem:[#allocation5 + $0x218] sm:$0xff]
    %v410 = vld [vmem:[#allocation5 + $0x220] sm:$0xff]
    %v411 = vld [vmem:[#allocation5 + $0x228] sm:$0xff]
    %v412 = vld [vmem:[#allocation5 + $0x230] sm:$0xff]
    %v413 = vld [vmem:[#allocation5 + $0x238] sm:$0xff]
    %v414 = vld [vmem:[#allocation5 + $0x240] sm:$0xff]
    %v415 = vld [vmem:[#allocation5 + $0x248] sm:$0xff]
    %v416 = vld [vmem:[#allocation5 + $0x250] sm:$0xff]
    %v417 = vld [vmem:[#allocation5 + $0x258] sm:$0xff]
    %v418 = vld [vmem:[#allocation5 + $0x260] sm:$0xff]
    %v419 = vld [vmem:[#allocation5 + $0x268] sm:$0xff]
    %v420 = vld [vmem:[#allocation5 + $0x270] sm:$0xff]
    %v421 = vld [vmem:[#allocation5 + $0x278] sm:$0xff]
    %v422 = vld [vmem:[#allocation5 + $0x280] sm:$0xff]
    %v423 = vld [vmem:[#allocation5 + $0x288] sm:$0xff]
    %v424 = vld [vmem:[#allocation5 + $0x290] sm:$0xff]
    %v425 = vld [vmem:[#allocation5 + $0x298] sm:$0xff]
    %v426 = vld [vmem:[#allocation5 + $0x2a0] sm:$0xff]
    %v427 = vld [vmem:[#allocation5 + $0x2a8] sm:$0xff]
    %v428 = vld [vmem:[#allocation5 + $0x2b0] sm:$0xff]
    %v429 = vld [vmem:[#allocation5 + $0x2b8] sm:$0xff]
    %v430 = vld [vmem:[#allocation5 + $0x2c0] sm:$0xff]
    %v431 = vld [vmem:[#allocation5 + $0x2c8] sm:$0xff]
    %v432 = vld [vmem:[#allocation5 + $0x2d0] sm:$0xff]
    %v433 = vld [vmem:[#allocation5 + $0x2d8] sm:$0xff]
    %v434 = vld [vmem:[#allocation5 + $0x2e0] sm:$0xff]
    %v435 = vld [vmem:[#allocation5 + $0x2e8] sm:$0xff]
    %v436 = vld [vmem:[#allocation5 + $0x2f0] sm:$0xff]
    %v437 = vld [vmem:[#allocation5 + $0x2f8] sm:$0xff]
    %v438 = vld [vmem:[#allocation5 + $0x300] sm:$0xff]
    %v439 = vld [vmem:[#allocation5 + $0x308] sm:$0xff]
    %v440 = vld [vmem:[#allocation5 + $0x310] sm:$0xff]
    %v441 = vld [vmem:[#allocation5 + $0x318] sm:$0xff]
    %v442 = vld [vmem:[#allocation5 + $0x320] sm:$0xff]
    %v443 = vld [vmem:[#allocation5 + $0x328] sm:$0xff]
    %v444 = vld [vmem:[#allocation5 + $0x330] sm:$0xff]
    %v445 = vld [vmem:[#allocation5 + $0x338] sm:$0xff]
    %v446 = vld [vmem:[#allocation5 + $0x340] sm:$0xff]
    %v447 = vld [vmem:[#allocation5 + $0x348] sm:$0xff]
    %v448 = vld [vmem:[#allocation5 + $0x350] sm:$0xff]
    %v449 = vld [vmem:[#allocation5 + $0x358] sm:$0xff]
    %v450 = vld [vmem:[#allocation5 + $0x360] sm:$0xff]
    %v451 = vld [vmem:[#allocation5 + $0x368] sm:$0xff]
    %v452 = vld [vmem:[#allocation5 + $0x370] sm:$0xff]
    %v453 = vld [vmem:[#allocation5 + $0x378] sm:$0xff]
    %v454 = vld [vmem:[#allocation5 + $0x380] sm:$0xff]
    %v455 = vld [vmem:[#allocation5 + $0x388] sm:$0xff]
    %v456 = vld [vmem:[#allocation5 + $0x390] sm:$0xff]
    %v457 = vld [vmem:[#allocation5 + $0x398] sm:$0xff]
    %v458 = vld [vmem:[#allocation5 + $0x3a0] sm:$0xff]
    %v459 = vld [vmem:[#allocation5 + $0x3a8] sm:$0xff]
    %v460 = vld [vmem:[#allocation5 + $0x3b0] sm:$0xff]
    %v461 = vld [vmem:[#allocation5 + $0x3b8] sm:$0xff]
    %v462 = vld [vmem:[#allocation5 + $0x3c0] sm:$0xff]
    %v463 = vld [vmem:[#allocation5 + $0x3c8] sm:$0xff]
    %v464 = vld [vmem:[#allocation5 + $0x3d0] sm:$0xff]
    %v465 = vld [vmem:[#allocation5 + $0x3d8] sm:$0xff]
    %v466 = vld [vmem:[#allocation5 + $0x3e0] sm:$0xff]
    %v467 = vld [vmem:[#allocation5 + $0x3e8] sm:$0xff]
    %v468 = vld [vmem:[#allocation5 + $0x3f0] sm:$0xff]
    %v469 = vld [vmem:[#allocation5 + $0x3f8] sm:$0xff]
    %v470 = vld [vmem:[#allocation5 + $0x400] sm:$0xff]
    %v471 = vld [vmem:[#allocation5 + $0x408] sm:$0xff]
    %v472 = vld [vmem:[#allocation5 + $0x410] sm:$0xff]
    %v473 = vld [vmem:[#allocation5 + $0x418] sm:$0xff]
    %v474 = vld [vmem:[#allocation5 + $0x420] sm:$0xff]
    %v475 = vld [vmem:[#allocation5 + $0x428] sm:$0xff]
    %v476 = vld [vmem:[#allocation5 + $0x430] sm:$0xff]
    %v477 = vld [vmem:[#allocation5 + $0x438] sm:$0xff]
    %v478 = vld [vmem:[#allocation5 + $0x440] sm:$0xff]
    %v479 = vld [vmem:[#allocation5 + $0x448] sm:$0xff]
    %v480 = vld [vmem:[#allocation5 + $0x450] sm:$0xff]
    %v481 = vld [vmem:[#allocation5 + $0x458] sm:$0xff]
    %v482 = vld [vmem:[#allocation5 + $0x460] sm:$0xff]
    %v483 = vld [vmem:[#allocation5 + $0x468] sm:$0xff]
    %v484 = vld [vmem:[#allocation5 + $0x470] sm:$0xff]
    %v485 = vld [vmem:[#allocation5 + $0x478] sm:$0xff]
    %v486 = vld [vmem:[#allocation5 + $0x480] sm:$0xff]
    %v487 = vld [vmem:[#allocation5 + $0x488] sm:$0xff]
    %v488 = vld [vmem:[#allocation5 + $0x490] sm:$0xff]
    %v489 = vld [vmem:[#allocation5 + $0x498] sm:$0xff]
    %v490 = vld [vmem:[#allocation5 + $0x4a0] sm:$0xff]
    %v491 = vld [vmem:[#allocation5 + $0x4a8] sm:$0xff]
    %v492 = vld [vmem:[#allocation5 + $0x4b0] sm:$0xff]
    %v493 = vld [vmem:[#allocation5 + $0x4b8] sm:$0xff]
    %v494 = vld [vmem:[#allocation5 + $0x4c0] sm:$0xff]
    %v495 = vld [vmem:[#allocation5 + $0x4c8] sm:$0xff]
    %v496 = vld [vmem:[#allocation5 + $0x4d0] sm:$0xff]
    %v497 = vld [vmem:[#allocation5 + $0x4d8] sm:$0xff]
    %v498 = vld [vmem:[#allocation5 + $0x4e0] sm:$0xff]
    %v499 = vld [vmem:[#allocation5 + $0x4e8] sm:$0xff]
    %v500 = vld [vmem:[#allocation5 + $0x4f0] sm:$0xff]
    %v501 = vld [vmem:[#allocation5 + $0x4f8] sm:$0xff]
    %v502 = vld [vmem:[#allocation5 + $0x500] sm:$0xff]
    %v503 = vld [vmem:[#allocation5 + $0x508] sm:$0xff]
    %v504 = vld [vmem:[#allocation5 + $0x510] sm:$0xff]
    %v505 = vld [vmem:[#allocation5 + $0x518] sm:$0xff]
    %v506 = vld [vmem:[#allocation5 + $0x520] sm:$0xff]
    %v507 = vld [vmem:[#allocation5 + $0x528] sm:$0xff]
    %v508 = vld [vmem:[#allocation5 + $0x530] sm:$0xff]
    %v509 = vld [vmem:[#allocation5 + $0x538] sm:$0xff]
    %v510 = vld [vmem:[#allocation5 + $0x540] sm:$0xff]
    %v511 = vld [vmem:[#allocation5 + $0x548] sm:$0xff]
    %v512 = vld [vmem:[#allocation5 + $0x550] sm:$0xff]
    %v513 = vld [vmem:[#allocation5 + $0x558] sm:$0xff]
    %v514 = vld [vmem:[#allocation5 + $0x560] sm:$0xff]
    %v515 = vld [vmem:[#allocation5 + $0x568] sm:$0xff]
    %v516 = vld [vmem:[#allocation5 + $0x570] sm:$0xff]
    %v517 = vld [vmem:[#allocation5 + $0x578] sm:$0xff]
    %v518 = vld [vmem:[#allocation5 + $0x580] sm:$0xff]
    %v519 = vld [vmem:[#allocation5 + $0x588] sm:$0xff]
    %v520 = vld [vmem:[#allocation5 + $0x590] sm:$0xff]
    %v521 = vld [vmem:[#allocation5 + $0x598] sm:$0xff]
    %v522 = vld [vmem:[#allocation5 + $0x5a0] sm:$0xff]
    %v523 = vld [vmem:[#allocation5 + $0x5a8] sm:$0xff]
    %v524 = vld [vmem:[#allocation5 + $0x5b0] sm:$0xff]
    %v525 = vld [vmem:[#allocation5 + $0x5b8] sm:$0xff]
    %v526 = vld [vmem:[#allocation5 + $0x5c0] sm:$0xff]
    %v527 = vld [vmem:[#allocation5 + $0x5c8] sm:$0xff]
    %v528 = vld [vmem:[#allocation5 + $0x5d0] sm:$0xff]
    %v529 = vld [vmem:[#allocation5 + $0x5d8] sm:$0xff]
    %v530 = vld [vmem:[#allocation5 + $0x5e0] sm:$0xff]
    %v531 = vld [vmem:[#allocation5 + $0x5e8] sm:$0xff]
    %v532 = vld [vmem:[#allocation5 + $0x5f0] sm:$0xff]
    %v533 = vld [vmem:[#allocation5 + $0x5f8] sm:$0xff]
    %v534 = vld [vmem:[#allocation5 + $0x600] sm:$0xff]
    %v535 = vld [vmem:[#allocation5 + $0x608] sm:$0xff]
    %v536 = vld [vmem:[#allocation5 + $0x610] sm:$0xff]
    %v537 = vld [vmem:[#allocation5 + $0x618] sm:$0xff]
    %v538 = vld [vmem:[#allocation5 + $0x620] sm:$0xff]
    %v539 = vld [vmem:[#allocation5 + $0x628] sm:$0xff]
    %v540 = vld [vmem:[#allocation5 + $0x630] sm:$0xff]
    %v541 = vld [vmem:[#allocation5 + $0x638] sm:$0xff]
    %v542 = vld [vmem:[#allocation5 + $0x640] sm:$0xff]
    %v543 = vld [vmem:[#allocation5 + $0x648] sm:$0xff]
    %v544 = vld [vmem:[#allocation5 + $0x650] sm:$0xff]
    %v545 = vld [vmem:[#allocation5 + $0x658] sm:$0xff]
    %v546 = vld [vmem:[#allocation5 + $0x660] sm:$0xff]
    %v547 = vld [vmem:[#allocation5 + $0x668] sm:$0xff]
    %v548 = vld [vmem:[#allocation5 + $0x670] sm:$0xff]
    %v549 = vld [vmem:[#allocation5 + $0x678] sm:$0xff]
    %v550 = vld [vmem:[#allocation5 + $0x680] sm:$0xff]
    %v551 = vld [vmem:[#allocation5 + $0x688] sm:$0xff]
    %v552 = vld [vmem:[#allocation5 + $0x690] sm:$0xff]
    %v553 = vld [vmem:[#allocation5 + $0x698] sm:$0xff]
    %v554 = vld [vmem:[#allocation5 + $0x6a0] sm:$0xff]
    %v555 = vld [vmem:[#allocation5 + $0x6a8] sm:$0xff]
    %v556 = vld [vmem:[#allocation5 + $0x6b0] sm:$0xff]
    %v557 = vld [vmem:[#allocation5 + $0x6b8] sm:$0xff]
    %v558 = vld [vmem:[#allocation5 + $0x6c0] sm:$0xff]
    %v559 = vld [vmem:[#allocation5 + $0x6c8] sm:$0xff]
    %v560 = vld [vmem:[#allocation5 + $0x6d0] sm:$0xff]
    %v561 = vld [vmem:[#allocation5 + $0x6d8] sm:$0xff]
    %v562 = vld [vmem:[#allocation5 + $0x6e0] sm:$0xff]
    %v563 = vld [vmem:[#allocation5 + $0x6e8] sm:$0xff]
    %v564 = vld [vmem:[#allocation5 + $0x6f0] sm:$0xff]
    %v565 = vld [vmem:[#allocation5 + $0x6f8] sm:$0xff]
    %v566 = vld [vmem:[#allocation5 + $0x700] sm:$0xff]
    %v567 = vld [vmem:[#allocation5 + $0x708] sm:$0xff]
    %v568 = vld [vmem:[#allocation5 + $0x710] sm:$0xff]
    %v569 = vld [vmem:[#allocation5 + $0x718] sm:$0xff]
    %v570 = vld [vmem:[#allocation5 + $0x720] sm:$0xff]
    %v571 = vld [vmem:[#allocation5 + $0x728] sm:$0xff]
    %v572 = vld [vmem:[#allocation5 + $0x730] sm:$0xff]
    %v573 = vld [vmem:[#allocation5 + $0x738] sm:$0xff]
    %v574 = vld [vmem:[#allocation5 + $0x740] sm:$0xff]
    %v575 = vld [vmem:[#allocation5 + $0x748] sm:$0xff]
    %v576 = vld [vmem:[#allocation5 + $0x750] sm:$0xff]
    %v577 = vld [vmem:[#allocation5 + $0x758] sm:$0xff]
    %v578 = vld [vmem:[#allocation5 + $0x760] sm:$0xff]
    %v579 = vld [vmem:[#allocation5 + $0x768] sm:$0xff]
    %v580 = vld [vmem:[#allocation5 + $0x770] sm:$0xff]
    %v581 = vld [vmem:[#allocation5 + $0x778] sm:$0xff]
    %v582 = vld [vmem:[#allocation5 + $0x780] sm:$0xff]
    %v583 = vld [vmem:[#allocation5 + $0x788] sm:$0xff]
    %v584 = vld [vmem:[#allocation5 + $0x790] sm:$0xff]
    %v585 = vld [vmem:[#allocation5 + $0x798] sm:$0xff]
    %v586 = vld [vmem:[#allocation5 + $0x7a0] sm:$0xff]
    %v587 = vld [vmem:[#allocation5 + $0x7a8] sm:$0xff]
    %v588 = vld [vmem:[#allocation5 + $0x7b0] sm:$0xff]
    %v589 = vld [vmem:[#allocation5 + $0x7b8] sm:$0xff]
    %v590 = vld [vmem:[#allocation5 + $0x7c0] sm:$0xff]
    %v591 = vld [vmem:[#allocation5 + $0x7c8] sm:$0xff]
    %v592 = vld [vmem:[#allocation5 + $0x7d0] sm:$0xff]
    %v593 = vld [vmem:[#allocation5 + $0x7d8] sm:$0xff]
    %v594 = vld [vmem:[#allocation5 + $0x7e0] sm:$0xff]
    %v595 = vld [vmem:[#allocation5 + $0x7e8] sm:$0xff]
    %v596 = vld [vmem:[#allocation5 + $0x7f0] sm:$0xff]
    %v597 = vld [vmem:[#allocation5 + $0x7f8] sm:$0xff]
    %v598 = vld [vmem:[#allocation5 + $0x800] sm:$0xff]
    %v599 = vld [vmem:[#allocation5 + $0x808] sm:$0xff]
    %v600 = vld [vmem:[#allocation5 + $0x810] sm:$0xff]
    %v601 = vld [vmem:[#allocation5 + $0x818] sm:$0xff]
    %v602 = vld [vmem:[#allocation5 + $0x820] sm:$0xff]
    %v603 = vld [vmem:[#allocation5 + $0x828] sm:$0xff]
    %v604 = vld [vmem:[#allocation5 + $0x830] sm:$0xff]
    %v605 = vld [vmem:[#allocation5 + $0x838] sm:$0xff]
    %v606 = vld [vmem:[#allocation5 + $0x840] sm:$0xff]
    %v607 = vld [vmem:[#allocation5 + $0x848] sm:$0xff]
    %v608 = vld [vmem:[#allocation5 + $0x850] sm:$0xff]
    %v609 = vld [vmem:[#allocation5 + $0x858] sm:$0xff]
    %v610 = vld [vmem:[#allocation5 + $0x860] sm:$0xff]
    %v611 = vld [vmem:[#allocation5 + $0x868] sm:$0xff]
    %v612 = vld [vmem:[#allocation5 + $0x870] sm:$0xff]
    %v613 = vld [vmem:[#allocation5 + $0x878] sm:$0xff]
    %v614 = vld [vmem:[#allocation5 + $0x880] sm:$0xff]
    %v615 = vld [vmem:[#allocation5 + $0x888] sm:$0xff]
    %v616 = vld [vmem:[#allocation5 + $0x890] sm:$0xff]
    %v617 = vld [vmem:[#allocation5 + $0x898] sm:$0xff]
    %v618 = vld [vmem:[#allocation5 + $0x8a0] sm:$0xff]
    %v619 = vld [vmem:[#allocation5 + $0x8a8] sm:$0xff]
    %v620 = vld [vmem:[#allocation5 + $0x8b0] sm:$0xff]
    %v621 = vld [vmem:[#allocation5 + $0x8b8] sm:$0xff]
    %v622 = vld [vmem:[#allocation5 + $0x8c0] sm:$0xff]
    %v623 = vld [vmem:[#allocation5 + $0x8c8] sm:$0xff]
    %v624 = vld [vmem:[#allocation5 + $0x8d0] sm:$0xff]
    %v625 = vld [vmem:[#allocation5 + $0x8d8] sm:$0xff]
    %v626 = vld [vmem:[#allocation5 + $0x8e0] sm:$0xff]
    %v627 = vld [vmem:[#allocation5 + $0x8e8] sm:$0xff]
    %v628 = vld [vmem:[#allocation5 + $0x8f0] sm:$0xff]
    %v629 = vld [vmem:[#allocation5 + $0x8f8] sm:$0xff]
    %v630 = vld [vmem:[#allocation5 + $0x900] sm:$0xff]
    %v631 = vld [vmem:[#allocation5 + $0x908] sm:$0xff]
    %v632 = vld [vmem:[#allocation5 + $0x910] sm:$0xff]
    %v633 = vld [vmem:[#allocation5 + $0x918] sm:$0xff]
    %v634 = vld [vmem:[#allocation5 + $0x920] sm:$0xff]
    %v635 = vld [vmem:[#allocation5 + $0x928] sm:$0xff]
    %v636 = vld [vmem:[#allocation5 + $0x930] sm:$0xff]
    %v637 = vld [vmem:[#allocation5 + $0x938] sm:$0xff]
    %v638 = vld [vmem:[#allocation5 + $0x940] sm:$0xff]
    %v639 = vld [vmem:[#allocation5 + $0x948] sm:$0xff]
    %v640 = vld [vmem:[#allocation5 + $0x950] sm:$0xff]
    %v641 = vld [vmem:[#allocation5 + $0x958] sm:$0xff]
    %v642 = vld [vmem:[#allocation5 + $0x960] sm:$0xff]
    %v643 = vld [vmem:[#allocation5 + $0x968] sm:$0xff]
    %v644 = vld [vmem:[#allocation5 + $0x970] sm:$0xff]
    %v645 = vld [vmem:[#allocation5 + $0x978] sm:$0xff]
    %v646 = vld [vmem:[#allocation5 + $0x980] sm:$0xff]
    %v647 = vld [vmem:[#allocation5 + $0x988] sm:$0xff]
    %v648 = vld [vmem:[#allocation5 + $0x990] sm:$0xff]
    %v649 = vld [vmem:[#allocation5 + $0x998] sm:$0xff]
    %v650 = vld [vmem:[#allocation5 + $0x9a0] sm:$0xff]
    %v651 = vld [vmem:[#allocation5 + $0x9a8] sm:$0xff]
    %v652 = vld [vmem:[#allocation5 + $0x9b0] sm:$0xff]
    %v653 = vld [vmem:[#allocation5 + $0x9b8] sm:$0xff]
    %v654 = vld [vmem:[#allocation5 + $0x9c0] sm:$0xff]
    %v655 = vld [vmem:[#allocation5 + $0x9c8] sm:$0xff]
    %v656 = vld [vmem:[#allocation5 + $0x9d0] sm:$0xff]
    %v657 = vld [vmem:[#allocation5 + $0x9d8] sm:$0xff]
    %v658 = vld [vmem:[#allocation5 + $0x9e0] sm:$0xff]
    %v659 = vld [vmem:[#allocation5 + $0x9e8] sm:$0xff]
    %v660 = vld [vmem:[#allocation5 + $0x9f0] sm:$0xff]
    %v661 = vld [vmem:[#allocation5 + $0x9f8] sm:$0xff]
    %v662 = vld [vmem:[#allocation5 + $0xa00] sm:$0xff]
    %v663 = vld [vmem:[#allocation5 + $0xa08] sm:$0xff]
    %v664 = vld [vmem:[#allocation5 + $0xa10] sm:$0xff]
    %v665 = vld [vmem:[#allocation5 + $0xa18] sm:$0xff]
    %v666 = vld [vmem:[#allocation5 + $0xa20] sm:$0xff]
    %v667 = vld [vmem:[#allocation5 + $0xa28] sm:$0xff]
    %v668 = vld [vmem:[#allocation5 + $0xa30] sm:$0xff]
    %v669 = vld [vmem:[#allocation5 + $0xa38] sm:$0xff]
    %v670 = vld [vmem:[#allocation5 + $0xa40] sm:$0xff]
    %v671 = vld [vmem:[#allocation5 + $0xa48] sm:$0xff]
    %v672 = vld [vmem:[#allocation5 + $0xa50] sm:$0xff]
    %v673 = vld [vmem:[#allocation5 + $0xa58] sm:$0xff]
    %v674 = vld [vmem:[#allocation5 + $0xa60] sm:$0xff]
    %v675 = vld [vmem:[#allocation5 + $0xa68] sm:$0xff]
    %v676 = vld [vmem:[#allocation5 + $0xa70] sm:$0xff]
    %v677 = vld [vmem:[#allocation5 + $0xa78] sm:$0xff]
    %v678 = vld [vmem:[#allocation5 + $0xa80] sm:$0xff]
    %v679 = vld [vmem:[#allocation5 + $0xa88] sm:$0xff]
    %v680 = vld [vmem:[#allocation5 + $0xa90] sm:$0xff]
    %v681 = vld [vmem:[#allocation5 + $0xa98] sm:$0xff]
    %v682 = vld [vmem:[#allocation5 + $0xaa0] sm:$0xff]
    %v683 = vld [vmem:[#allocation5 + $0xaa8] sm:$0xff]
    %v684 = vld [vmem:[#allocation5 + $0xab0] sm:$0xff]
    %v685 = vld [vmem:[#allocation5 + $0xab8] sm:$0xff]
    %v686 = vld [vmem:[#allocation5 + $0xac0] sm:$0xff]
    %v687 = vld [vmem:[#allocation5 + $0xac8] sm:$0xff]
    %v688 = vld [vmem:[#allocation5 + $0xad0] sm:$0xff]
    %v689 = vld [vmem:[#allocation5 + $0xad8] sm:$0xff]
    %v690 = vld [vmem:[#allocation5 + $0xae0] sm:$0xff]
    %v691 = vld [vmem:[#allocation5 + $0xae8] sm:$0xff]
    %v692 = vld [vmem:[#allocation5 + $0xaf0] sm:$0xff]
    %v693 = vld [vmem:[#allocation5 + $0xaf8] sm:$0xff]
    %v694 = vld [vmem:[#allocation5 + $0xb00] sm:$0xff]
    %v695 = vld [vmem:[#allocation5 + $0xb08] sm:$0xff]
    %v696 = vld [vmem:[#allocation5 + $0xb10] sm:$0xff]
    %v697 = vld [vmem:[#allocation5 + $0xb18] sm:$0xff]
    %v698 = vld [vmem:[#allocation5 + $0xb20] sm:$0xff]
    %v699 = vld [vmem:[#allocation5 + $0xb28] sm:$0xff]
    %v700 = vld [vmem:[#allocation5 + $0xb30] sm:$0xff]
    %v701 = vld [vmem:[#allocation5 + $0xb38] sm:$0xff]
    %v702 = vld [vmem:[#allocation5 + $0xb40] sm:$0xff]
    %v703 = vld [vmem:[#allocation5 + $0xb48] sm:$0xff]
    %v704 = vld [vmem:[#allocation5 + $0xb50] sm:$0xff]
    %v705 = vld [vmem:[#allocation5 + $0xb58] sm:$0xff]
    %v706 = vld [vmem:[#allocation5 + $0xb60] sm:$0xff]
    %v707 = vld [vmem:[#allocation5 + $0xb68] sm:$0xff]
    %v708 = vld [vmem:[#allocation5 + $0xb70] sm:$0xff]
    %v709 = vld [vmem:[#allocation5 + $0xb78] sm:$0xff]
    %v710 = vld [vmem:[#allocation5 + $0xb80] sm:$0xff]
    %v711 = vld [vmem:[#allocation5 + $0xb88] sm:$0xff]
    %v712 = vld [vmem:[#allocation5 + $0xb90] sm:$0xff]
    %v713 = vld [vmem:[#allocation5 + $0xb98] sm:$0xff]
    %v714 = vld [vmem:[#allocation5 + $0xba0] sm:$0xff]
    %v715 = vld [vmem:[#allocation5 + $0xba8] sm:$0xff]
    %v716 = vld [vmem:[#allocation5 + $0xbb0] sm:$0xff]
    %v717 = vld [vmem:[#allocation5 + $0xbb8] sm:$0xff]
    %v718 = vld [vmem:[#allocation5 + $0xbc0] sm:$0xff]
    %v719 = vld [vmem:[#allocation5 + $0xbc8] sm:$0xff]
    %v720 = vld [vmem:[#allocation5 + $0xbd0] sm:$0xff]
    %v721 = vld [vmem:[#allocation5 + $0xbd8] sm:$0xff]
    %v722 = vld [vmem:[#allocation5 + $0xbe0] sm:$0xff]
    %v723 = vld [vmem:[#allocation5 + $0xbe8] sm:$0xff]
    %v724 = vld [vmem:[#allocation5 + $0xbf0] sm:$0xff]
    %v725 = vld [vmem:[#allocation5 + $0xbf8] sm:$0xff]
    %v726 = vld [vmem:[#allocation5 + $0xc00] sm:$0xff]
    %v727 = vld [vmem:[#allocation5 + $0xc08] sm:$0xff]
    %v728 = vld [vmem:[#allocation5 + $0xc10] sm:$0xff]
    %v729 = vld [vmem:[#allocation5 + $0xc18] sm:$0xff]
    %v730 = vld [vmem:[#allocation5 + $0xc20] sm:$0xff]
    %v731 = vld [vmem:[#allocation5 + $0xc28] sm:$0xff]
    %v732 = vld [vmem:[#allocation5 + $0xc30] sm:$0xff]
    %v733 = vld [vmem:[#allocation5 + $0xc38] sm:$0xff]
    %v734 = vld [vmem:[#allocation5 + $0xc40] sm:$0xff]
    %v735 = vld [vmem:[#allocation5 + $0xc48] sm:$0xff]
    %v736 = vld [vmem:[#allocation5 + $0xc50] sm:$0xff]
    %v737 = vld [vmem:[#allocation5 + $0xc58] sm:$0xff]
    %v738 = vld [vmem:[#allocation5 + $0xc60] sm:$0xff]
    %v739 = vld [vmem:[#allocation5 + $0xc68] sm:$0xff]
    %v740 = vld [vmem:[#allocation5 + $0xc70] sm:$0xff]
    %v741 = vld [vmem:[#allocation5 + $0xc78] sm:$0xff]
    %v742 = vld [vmem:[#allocation5 + $0xc80] sm:$0xff]
    %v743 = vld [vmem:[#allocation5 + $0xc88] sm:$0xff]
    %v744 = vld [vmem:[#allocation5 + $0xc90] sm:$0xff]
    %v745 = vld [vmem:[#allocation5 + $0xc98] sm:$0xff]
    %v746 = vld [vmem:[#allocation5 + $0xca0] sm:$0xff]
    %v747 = vld [vmem:[#allocation5 + $0xca8] sm:$0xff]
    %v748 = vld [vmem:[#allocation5 + $0xcb0] sm:$0xff]
    %v749 = vld [vmem:[#allocation5 + $0xcb8] sm:$0xff]
    %v750 = vld [vmem:[#allocation5 + $0xcc0] sm:$0xff]
    %v751 = vld [vmem:[#allocation5 + $0xcc8] sm:$0xff]
    %v752 = vld [vmem:[#allocation5 + $0xcd0] sm:$0xff]
    %v753 = vld [vmem:[#allocation5 + $0xcd8] sm:$0xff]
    %v754 = vld [vmem:[#allocation5 + $0xce0] sm:$0xff]
    %v755 = vld [vmem:[#allocation5 + $0xce8] sm:$0xff]
    %v756 = vld [vmem:[#allocation5 + $0xcf0] sm:$0xff]
    %v757 = vld [vmem:[#allocation5 + $0xcf8] sm:$0xff]
    %v758 = vld [vmem:[#allocation5 + $0xd00] sm:$0xff]
    %v759 = vld [vmem:[#allocation5 + $0xd08] sm:$0xff]
    %v760 = vld [vmem:[#allocation5 + $0xd10] sm:$0xff]
    %v761 = vld [vmem:[#allocation5 + $0xd18] sm:$0xff]
    %v762 = vld [vmem:[#allocation5 + $0xd20] sm:$0xff]
    %v763 = vld [vmem:[#allocation5 + $0xd28] sm:$0xff]
    %v764 = vld [vmem:[#allocation5 + $0xd30] sm:$0xff]
    %v765 = vld [vmem:[#allocation5 + $0xd38] sm:$0xff]
    %v766 = vld [vmem:[#allocation5 + $0xd40] sm:$0xff]
    %v767 = vld [vmem:[#allocation5 + $0xd48] sm:$0xff]
    %v768 = vld [vmem:[#allocation5 + $0xd50] sm:$0xff]
    %v769 = vld [vmem:[#allocation5 + $0xd58] sm:$0xff]
    %v770 = vld [vmem:[#allocation5 + $0xd60] sm:$0xff]
    %v771 = vld [vmem:[#allocation5 + $0xd68] sm:$0xff]
    %v772 = vld [vmem:[#allocation5 + $0xd70] sm:$0xff]
    %v773 = vld [vmem:[#allocation5 + $0xd78] sm:$0xff]
    %v774 = vld [vmem:[#allocation5 + $0xd80] sm:$0xff]
    %v775 = vld [vmem:[#allocation5 + $0xd88] sm:$0xff]
    %v776 = vld [vmem:[#allocation5 + $0xd90] sm:$0xff]
    %v777 = vld [vmem:[#allocation5 + $0xd98] sm:$0xff]
    %v778 = vld [vmem:[#allocation5 + $0xda0] sm:$0xff]
    %v779 = vld [vmem:[#allocation5 + $0xda8] sm:$0xff]
    %v780 = vld [vmem:[#allocation5 + $0xdb0] sm:$0xff]
    %v781 = vld [vmem:[#allocation5 + $0xdb8] sm:$0xff]
    %v782 = vld [vmem:[#allocation5 + $0xdc0] sm:$0xff]
    %v783 = vld [vmem:[#allocation5 + $0xdc8] sm:$0xff]
    %v784 = vld [vmem:[#allocation5 + $0xdd0] sm:$0xff]
    %v785 = vld [vmem:[#allocation5 + $0xdd8] sm:$0xff]
    %v786 = vld [vmem:[#allocation5 + $0xde0] sm:$0xff]
    %v787 = vld [vmem:[#allocation5 + $0xde8] sm:$0xff]
    %v788 = vld [vmem:[#allocation5 + $0xdf0] sm:$0xff]
    %v789 = vld [vmem:[#allocation5 + $0xdf8] sm:$0xff]
    %v790 = vld [vmem:[#allocation5 + $0xe00] sm:$0xff]
    %v791 = vld [vmem:[#allocation5 + $0xe08] sm:$0xff]
    %v792 = vld [vmem:[#allocation5 + $0xe10] sm:$0xff]
    %v793 = vld [vmem:[#allocation5 + $0xe18] sm:$0xff]
    %v794 = vld [vmem:[#allocation5 + $0xe20] sm:$0xff]
    %v795 = vld [vmem:[#allocation5 + $0xe28] sm:$0xff]
    %v796 = vld [vmem:[#allocation5 + $0xe30] sm:$0xff]
    %v797 = vld [vmem:[#allocation5 + $0xe38] sm:$0xff]
    %v798 = vld [vmem:[#allocation5 + $0xe40] sm:$0xff]
    %v799 = vld [vmem:[#allocation5 + $0xe48] sm:$0xff]
    %v800 = vld [vmem:[#allocation5 + $0xe50] sm:$0xff]
    %v801 = vld [vmem:[#allocation5 + $0xe58] sm:$0xff]
    %v802 = vld [vmem:[#allocation5 + $0xe60] sm:$0xff]
    %v803 = vld [vmem:[#allocation5 + $0xe68] sm:$0xff]
    %v804 = vld [vmem:[#allocation5 + $0xe70] sm:$0xff]
    %v805 = vld [vmem:[#allocation5 + $0xe78] sm:$0xff]
    %v806 = vld [vmem:[#allocation5 + $0xe80] sm:$0xff]
    %v807 = vld [vmem:[#allocation5 + $0xe88] sm:$0xff]
    %v808 = vld [vmem:[#allocation5 + $0xe90] sm:$0xff]
    %v809 = vld [vmem:[#allocation5 + $0xe98] sm:$0xff]
    %v810 = vld [vmem:[#allocation5 + $0xea0] sm:$0xff]
    %v811 = vld [vmem:[#allocation5 + $0xea8] sm:$0xff]
    %v812 = vld [vmem:[#allocation5 + $0xeb0] sm:$0xff]
    %v813 = vld [vmem:[#allocation5 + $0xeb8] sm:$0xff]
    %v814 = vld [vmem:[#allocation5 + $0xec0] sm:$0xff]
    %v815 = vld [vmem:[#allocation5 + $0xec8] sm:$0xff]
    %v816 = vld [vmem:[#allocation5 + $0xed0] sm:$0xff]
    %v817 = vld [vmem:[#allocation5 + $0xed8] sm:$0xff]
    %v818 = vld [vmem:[#allocation5 + $0xee0] sm:$0xff]
    %v819 = vld [vmem:[#allocation5 + $0xee8] sm:$0xff]
    %v820 = vld [vmem:[#allocation5 + $0xef0] sm:$0xff]
    %v821 = vld [vmem:[#allocation5 + $0xef8] sm:$0xff]
    %v822 = vld [vmem:[#allocation5 + $0xf00] sm:$0xff]
    %v823 = vld [vmem:[#allocation5 + $0xf08] sm:$0xff]
    %v824 = vld [vmem:[#allocation5 + $0xf10] sm:$0xff]
    %v825 = vld [vmem:[#allocation5 + $0xf18] sm:$0xff]
    %v826 = vld [vmem:[#allocation5 + $0xf20] sm:$0xff]
    %v827 = vld [vmem:[#allocation5 + $0xf28] sm:$0xff]
    %v828 = vld [vmem:[#allocation5 + $0xf30] sm:$0xff]
    %v829 = vld [vmem:[#allocation5 + $0xf38] sm:$0xff]
    %v830 = vld [vmem:[#allocation5 + $0xf40] sm:$0xff]
    %v831 = vld [vmem:[#allocation5 + $0xf48] sm:$0xff]
    %v832 = vld [vmem:[#allocation5 + $0xf50] sm:$0xff]
    %v833 = vld [vmem:[#allocation5 + $0xf58] sm:$0xff]
    %v834 = vld [vmem:[#allocation5 + $0xf60] sm:$0xff]
    %v835 = vld [vmem:[#allocation5 + $0xf68] sm:$0xff]
    %v836 = vld [vmem:[#allocation5 + $0xf70] sm:$0xff]
    %v837 = vld [vmem:[#allocation5 + $0xf78] sm:$0xff]
    %v838 = vld [vmem:[#allocation5 + $0xf80] sm:$0xff]
    %v839 = vld [vmem:[#allocation5 + $0xf88] sm:$0xff]
    %v840 = vld [vmem:[#allocation5 + $0xf90] sm:$0xff]
    %v841 = vld [vmem:[#allocation5 + $0xf98] sm:$0xff]
    %v842 = vld [vmem:[#allocation5 + $0xfa0] sm:$0xff]
    %v843 = vld [vmem:[#allocation5 + $0xfa8] sm:$0xff]
    %v844 = vld [vmem:[#allocation5 + $0xfb0] sm:$0xff]
    %v845 = vld [vmem:[#allocation5 + $0xfb8] sm:$0xff]
    %v846 = vld [vmem:[#allocation5 + $0xfc0] sm:$0xff]
    %v847 = vld [vmem:[#allocation5 + $0xfc8] sm:$0xff]
    %v848 = vld [vmem:[#allocation5 + $0xfd0] sm:$0xff]
    %v849 = vld [vmem:[#allocation5 + $0xfd8] sm:$0xff]
    %v850 = vld [vmem:[#allocation5 + $0xfe0] sm:$0xff]
    %v851 = vld [vmem:[#allocation5 + $0xfe8] sm:$0xff]
    %v852 = vld [vmem:[#allocation5 + $0xff0] sm:$0xff]
    %v853 = vld [vmem:[#allocation5 + $0xff8] sm:$0xff]
    %v854 = vld [vmem:[#allocation7] sm:$0xff]
    %v856 = vlaneseq
    %v857 = vshrl.u32 %v856, 7
    %v858 = vsub.s32 0, %v857
    %v859 = vrot.slane %v854, %v858
    %v860 = vlaneseq
    %v861 = vshrl.u32 %v860, 7
    %v862 = vsub.s32 1, %v861
    %v863 = vrot.slane %v854, %v862
    %v864 = vlaneseq
    %v865 = vshrl.u32 %v864, 7
    %v866 = vsub.s32 2, %v865
    %v867 = vrot.slane %v854, %v866
    %v868 = vlaneseq
    %v869 = vshrl.u32 %v868, 7
    %v870 = vsub.s32 3, %v869
    %v871 = vrot.slane %v854, %v870
    %v872 = vlaneseq
    %v873 = vshrl.u32 %v872, 7
    %v874 = vsub.s32 4, %v873
    %v875 = vrot.slane %v854, %v874
    %v876 = vlaneseq
    %v877 = vshrl.u32 %v876, 7
    %v878 = vsub.s32 5, %v877
    %v879 = vrot.slane %v854, %v878
    %v880 = vlaneseq
    %v881 = vshrl.u32 %v880, 7
    %v882 = vsub.s32 6, %v881
    %v883 = vrot.slane %v854, %v882
    %v884 = vlaneseq
    %v885 = vshrl.u32 %v884, 7
    %v886 = vsub.s32 7, %v885
    %v887 = vrot.slane %v854, %v886
    %vm928 = vcmask 1041409
    %v929 = vsel %vm928, %v152, %v124
    %vm930 = vcmask 1042434
    %v931 = vsel %vm930, %v180, %v929
    %vm932 = vcmask 1043459
    %v933 = vsel %vm932, %v208, %v931
    %vm934 = vcmask 1044484
    %v935 = vsel %vm934, %v236, %v933
    %vm936 = vcmask 1045509
    %v937 = vsel %vm936, %v264, %v935
    %vm938 = vcmask 1046534
    %v939 = vsel %vm938, %v292, %v937
    %vm940 = vcmask 1047559
    %v941 = vsel %vm940, %v320, %v939
    %v942 = vsel %vm928, %v159, %v131
    %v943 = vsel %vm930, %v187, %v942
    %v944 = vsel %vm932, %v215, %v943
    %v945 = vsel %vm934, %v243, %v944
    %v946 = vsel %vm936, %v271, %v945
    %v947 = vsel %vm938, %v299, %v946
    %v948 = vsel %vm940, %v327, %v947
    %v949 = vsel %vm928, %v166, %v138
    %v950 = vsel %vm930, %v194, %v949
    %v951 = vsel %vm932, %v222, %v950
    %v952 = vsel %vm934, %v250, %v951
    %v953 = vsel %vm936, %v278, %v952
    %v954 = vsel %vm938, %v306, %v953
    %v955 = vsel %vm940, %v334, %v954
    %v956 = vsel %vm928, %v173, %v145
    %v957 = vsel %vm930, %v201, %v956
    %v958 = vsel %vm932, %v229, %v957
    %v959 = vsel %vm934, %v257, %v958
    %v960 = vsel %vm936, %v285, %v959
    %v961 = vsel %vm938, %v313, %v960
    %v962 = vsel %vm940, %v341, %v961
    %967 = vmatprep.subr.mxu0 %v343
    %968 = vmatpush1.msra.mxu0 %v342
    %969 = vmatprep.subr.mxu0 %v351
    %970 = vmatpush1.msra.mxu0 %v350
    %971 = vmatprep.subr.mxu0 %v359
    %972 = vmatpush1.msra.mxu0 %v358
    %973 = vmatprep.subr.mxu0 %v367
    %974 = vmatpush1.msra.mxu0 %v366
    %975 = vmatprep.subr.mxu0 %v375
    %976 = vmatpush1.msra.mxu0 %v374
    %977 = vmatprep.subr.mxu0 %v383
    %978 = vmatpush1.msra.mxu0 %v382
    %979 = vmatprep.subr.mxu0 %v391
    %980 = vmatpush1.msra.mxu0 %v390
    %981 = vmatprep.subr.mxu0 %v399
    %982 = vmatpush1.msra.mxu0 %v398
    %983 = vmatprep.subr.mxu0 %v407
    %984 = vmatpush1.msra.mxu0 %v406
    %985 = vmatprep.subr.mxu0 %v415
    %986 = vmatpush1.msra.mxu0 %v414
    %987 = vmatprep.subr.mxu0 %v423
    %988 = vmatpush1.msra.mxu0 %v422
    %989 = vmatprep.subr.mxu0 %v431
    %990 = vmatpush1.msra.mxu0 %v430
    %991 = vmatprep.subr.mxu0 %v439
    %992 = vmatpush1.msra.mxu0 %v438
    %993 = vmatprep.subr.mxu0 %v447
    %994 = vmatpush1.msra.mxu0 %v446
    %995 = vmatprep.subr.mxu0 %v455
    %996 = vmatpush1.msra.mxu0 %v454
    %997 = vmatprep.subr.mxu0 %v463
    %998 = vmatpush1.msra.mxu0 %v462
    %999 = vmatprep.subr.mxu0 %v471
    %1000 = vmatpush1.msra.mxu0 %v470
    %1001 = vmatprep.subr.mxu0 %v479
    %1002 = vmatpush1.msra.mxu0 %v478
    %1003 = vmatprep.subr.mxu0 %v487
    %1004 = vmatpush1.msra.mxu0 %v486
    %1005 = vmatprep.subr.mxu0 %v495
    %1006 = vmatpush1.msra.mxu0 %v494
    %1007 = vmatprep.subr.mxu0 %v503
    %1008 = vmatpush1.msra.mxu0 %v502
    %1009 = vmatprep.subr.mxu0 %v511
    %1010 = vmatpush1.msra.mxu0 %v510
    %1011 = vmatprep.subr.mxu0 %v519
    %1012 = vmatpush1.msra.mxu0 %v518
    %1013 = vmatprep.subr.mxu0 %v527
    %1014 = vmatpush1.msra.mxu0 %v526
    %1015 = vmatprep.subr.mxu0 %v535
    %1016 = vmatpush1.msra.mxu0 %v534
    %1017 = vmatprep.subr.mxu0 %v543
    %1018 = vmatpush1.msra.mxu0 %v542
    %1019 = vmatprep.subr.mxu0 %v551
    %1020 = vmatpush1.msra.mxu0 %v550
    %1021 = vmatprep.subr.mxu0 %v559
    %1022 = vmatpush1.msra.mxu0 %v558
    %1023 = vmatprep.subr.mxu0 %v567
    %1024 = vmatpush1.msra.mxu0 %v566
    %1025 = vmatprep.subr.mxu0 %v575
    %1026 = vmatpush1.msra.mxu0 %v574
    %1027 = vmatprep.subr.mxu0 %v583
    %1028 = vmatpush1.msra.mxu0 %v582
    %1029 = vmatprep.subr.mxu0 %v591
    %1030 = vmatpush1.msra.mxu0 %v590
    %1031 = vmatprep.mubr.f32.mxu0 %v948
    %1032 = vmatmul.mubr.f32.gmra.mrb[0].mxu0 %v941
    %v1033 = vpop.f32.mrb[0].mxu0
    %v1034 = vadd.f32 %v859, %v1033
    %v1035 = vpop.f32.mrb[0].mxu0
    %v1036 = vadd.f32 %v863, %v1035
    %1037 = vdwg.mxu0
    %1038 = vmatprep.subr.mxu0 %v599
    %1039 = vmatpush1.msra.mxu0 %v598
    %1040 = vmatprep.subr.mxu0 %v607
    %1041 = vmatpush1.msra.mxu0 %v606
    %1042 = vmatprep.subr.mxu0 %v615
    %1043 = vmatpush1.msra.mxu0 %v614
    %1044 = vmatprep.subr.mxu0 %v623
    %1045 = vmatpush1.msra.mxu0 %v622
    %1046 = vmatprep.subr.mxu0 %v631
    %1047 = vmatpush1.msra.mxu0 %v630
    %1048 = vmatprep.subr.mxu0 %v639
    %1049 = vmatpush1.msra.mxu0 %v638
    %1050 = vmatprep.subr.mxu0 %v647
    %1051 = vmatpush1.msra.mxu0 %v646
    %1052 = vmatprep.subr.mxu0 %v655
    %1053 = vmatpush1.msra.mxu0 %v654
    %1054 = vmatprep.subr.mxu0 %v663
    %1055 = vmatpush1.msra.mxu0 %v662
    %1056 = vmatprep.subr.mxu0 %v671
    %1057 = vmatpush1.msra.mxu0 %v670
    %1058 = vmatprep.subr.mxu0 %v679
    %1059 = vmatpush1.msra.mxu0 %v678
    %1060 = vmatprep.subr.mxu0 %v687
    %1061 = vmatpush1.msra.mxu0 %v686
    %1062 = vmatprep.subr.mxu0 %v695
    %1063 = vmatpush1.msra.mxu0 %v694
    %1064 = vmatprep.subr.mxu0 %v703
    %1065 = vmatpush1.msra.mxu0 %v702
    %1066 = vmatprep.subr.mxu0 %v711
    %1067 = vmatpush1.msra.mxu0 %v710
    %1068 = vmatprep.subr.mxu0 %v719
    %1069 = vmatpush1.msra.mxu0 %v718
    %1070 = vmatprep.subr.mxu0 %v727
    %1071 = vmatpush1.msra.mxu0 %v726
    %1072 = vmatprep.subr.mxu0 %v735
    %1073 = vmatpush1.msra.mxu0 %v734
    %1074 = vmatprep.subr.mxu0 %v743
    %1075 = vmatpush1.msra.mxu0 %v742
    %1076 = vmatprep.subr.mxu0 %v751
    %1077 = vmatpush1.msra.mxu0 %v750
    %1078 = vmatprep.subr.mxu0 %v759
    %1079 = vmatpush1.msra.mxu0 %v758
    %1080 = vmatprep.subr.mxu0 %v767
    %1081 = vmatpush1.msra.mxu0 %v766
    %1082 = vmatprep.subr.mxu0 %v775
    %1083 = vmatpush1.msra.mxu0 %v774
    %1084 = vmatprep.subr.mxu0 %v783
    %1085 = vmatpush1.msra.mxu0 %v782
    %1086 = vmatprep.subr.mxu0 %v791
    %1087 = vmatpush1.msra.mxu0 %v790
    %1088 = vmatprep.subr.mxu0 %v799
    %1089 = vmatpush1.msra.mxu0 %v798
    %1090 = vmatprep.subr.mxu0 %v807
    %1091 = vmatpush1.msra.mxu0 %v806
    %1092 = vmatprep.subr.mxu0 %v815
    %1093 = vmatpush1.msra.mxu0 %v814
    %1094 = vmatprep.subr.mxu0 %v823
    %1095 = vmatpush1.msra.mxu0 %v822
    %1096 = vmatprep.subr.mxu0 %v831
    %1097 = vmatpush1.msra.mxu0 %v830
    %1098 = vmatprep.subr.mxu0 %v839
    %1099 = vmatpush1.msra.mxu0 %v838
    %1100 = vmatprep.subr.mxu0 %v847
    %1101 = vmatpush1.msra.mxu0 %v846
    %1102 = vmatprep.mubr.f32.mxu0 %v962
    %1103 = vmatmul.mubr.f32.gmra.mrb[0].mxu0 %v955
    %v1104 = vpop.f32.mrb[0].mxu0
    %v1105 = vadd.f32 %v1034, %v1104
    %v1106 = vpop.f32.mrb[0].mxu0
    %v1107 = vadd.f32 %v1036, %v1106
    %1108 = vdwg.mxu0
    %1109 = vmatprep.subr.mxu0 %v345
    %1110 = vmatpush1.msra.mxu0 %v344
    %1111 = vmatprep.subr.mxu0 %v353
    %1112 = vmatpush1.msra.mxu0 %v352
    %1113 = vmatprep.subr.mxu0 %v361
    %1114 = vmatpush1.msra.mxu0 %v360
    %1115 = vmatprep.subr.mxu0 %v369
    %1116 = vmatpush1.msra.mxu0 %v368
    %1117 = vmatprep.subr.mxu0 %v377
    %1118 = vmatpush1.msra.mxu0 %v376
    %1119 = vmatprep.subr.mxu0 %v385
    %1120 = vmatpush1.msra.mxu0 %v384
    %1121 = vmatprep.subr.mxu0 %v393
    %1122 = vmatpush1.msra.mxu0 %v392
    %1123 = vmatprep.subr.mxu0 %v401
    %1124 = vmatpush1.msra.mxu0 %v400
    %1125 = vmatprep.subr.mxu0 %v409
    %1126 = vmatpush1.msra.mxu0 %v408
    %1127 = vmatprep.subr.mxu0 %v417
    %1128 = vmatpush1.msra.mxu0 %v416
    %1129 = vmatprep.subr.mxu0 %v425
    %1130 = vmatpush1.msra.mxu0 %v424
    %1131 = vmatprep.subr.mxu0 %v433
    %1132 = vmatpush1.msra.mxu0 %v432
    %1133 = vmatprep.subr.mxu0 %v441
    %1134 = vmatpush1.msra.mxu0 %v440
    %1135 = vmatprep.subr.mxu0 %v449
    %1136 = vmatpush1.msra.mxu0 %v448
    %1137 = vmatprep.subr.mxu0 %v457
    %1138 = vmatpush1.msra.mxu0 %v456
    %1139 = vmatprep.subr.mxu0 %v465
    %1140 = vmatpush1.msra.mxu0 %v464
    %1141 = vmatprep.subr.mxu0 %v473
    %1142 = vmatpush1.msra.mxu0 %v472
    %1143 = vmatprep.subr.mxu0 %v481
    %1144 = vmatpush1.msra.mxu0 %v480
    %1145 = vmatprep.subr.mxu0 %v489
    %1146 = vmatpush1.msra.mxu0 %v488
    %1147 = vmatprep.subr.mxu0 %v497
    %1148 = vmatpush1.msra.mxu0 %v496
    %1149 = vmatprep.subr.mxu0 %v505
    %1150 = vmatpush1.msra.mxu0 %v504
    %1151 = vmatprep.subr.mxu0 %v513
    %1152 = vmatpush1.msra.mxu0 %v512
    %1153 = vmatprep.subr.mxu0 %v521
    %1154 = vmatpush1.msra.mxu0 %v520
    %1155 = vmatprep.subr.mxu0 %v529
    %1156 = vmatpush1.msra.mxu0 %v528
    %1157 = vmatprep.subr.mxu0 %v537
    %1158 = vmatpush1.msra.mxu0 %v536
    %1159 = vmatprep.subr.mxu0 %v545
    %1160 = vmatpush1.msra.mxu0 %v544
    %1161 = vmatprep.subr.mxu0 %v553
    %1162 = vmatpush1.msra.mxu0 %v552
    %1163 = vmatprep.subr.mxu0 %v561
    %1164 = vmatpush1.msra.mxu0 %v560
    %1165 = vmatprep.subr.mxu0 %v569
    %1166 = vmatpush1.msra.mxu0 %v568
    %1167 = vmatprep.subr.mxu0 %v577
    %1168 = vmatpush1.msra.mxu0 %v576
    %1169 = vmatprep.subr.mxu0 %v585
    %1170 = vmatpush1.msra.mxu0 %v584
    %1171 = vmatprep.subr.mxu0 %v593
    %1172 = vmatpush1.msra.mxu0 %v592
    %1173 = vmatprep.mubr.f32.mxu0 %v948
    %1174 = vmatmul.mubr.f32.gmra.mrb[0].mxu0 %v941
    %v1175 = vpop.f32.mrb[0].mxu0
    %v1176 = vadd.f32 %v867, %v1175
    %v1177 = vpop.f32.mrb[0].mxu0
    %v1178 = vadd.f32 %v871, %v1177
    %1179 = vdwg.mxu0
    %1180 = vmatprep.subr.mxu0 %v601
    %1181 = vmatpush1.msra.mxu0 %v600
    %1182 = vmatprep.subr.mxu0 %v609
    %1183 = vmatpush1.msra.mxu0 %v608
    %1184 = vmatprep.subr.mxu0 %v617
    %1185 = vmatpush1.msra.mxu0 %v616
    %1186 = vmatprep.subr.mxu0 %v625
    %1187 = vmatpush1.msra.mxu0 %v624
    %1188 = vmatprep.subr.mxu0 %v633
    %1189 = vmatpush1.msra.mxu0 %v632
    %1190 = vmatprep.subr.mxu0 %v641
    %1191 = vmatpush1.msra.mxu0 %v640
    %1192 = vmatprep.subr.mxu0 %v649
    %1193 = vmatpush1.msra.mxu0 %v648
    %1194 = vmatprep.subr.mxu0 %v657
    %1195 = vmatpush1.msra.mxu0 %v656
    %1196 = vmatprep.subr.mxu0 %v665
    %1197 = vmatpush1.msra.mxu0 %v664
    %1198 = vmatprep.subr.mxu0 %v673
    %1199 = vmatpush1.msra.mxu0 %v672
    %1200 = vmatprep.subr.mxu0 %v681
    %1201 = vmatpush1.msra.mxu0 %v680
    %1202 = vmatprep.subr.mxu0 %v689
    %1203 = vmatpush1.msra.mxu0 %v688
    %1204 = vmatprep.subr.mxu0 %v697
    %1205 = vmatpush1.msra.mxu0 %v696
    %1206 = vmatprep.subr.mxu0 %v705
    %1207 = vmatpush1.msra.mxu0 %v704
    %1208 = vmatprep.subr.mxu0 %v713
    %1209 = vmatpush1.msra.mxu0 %v712
    %1210 = vmatprep.subr.mxu0 %v721
    %1211 = vmatpush1.msra.mxu0 %v720
    %1212 = vmatprep.subr.mxu0 %v729
    %1213 = vmatpush1.msra.mxu0 %v728
    %1214 = vmatprep.subr.mxu0 %v737
    %1215 = vmatpush1.msra.mxu0 %v736
    %1216 = vmatprep.subr.mxu0 %v745
    %1217 = vmatpush1.msra.mxu0 %v744
    %1218 = vmatprep.subr.mxu0 %v753
    %1219 = vmatpush1.msra.mxu0 %v752
    %1220 = vmatprep.subr.mxu0 %v761
    %1221 = vmatpush1.msra.mxu0 %v760
    %1222 = vmatprep.subr.mxu0 %v769
    %1223 = vmatpush1.msra.mxu0 %v768
    %1224 = vmatprep.subr.mxu0 %v777
    %1225 = vmatpush1.msra.mxu0 %v776
    %1226 = vmatprep.subr.mxu0 %v785
    %1227 = vmatpush1.msra.mxu0 %v784
    %1228 = vmatprep.subr.mxu0 %v793
    %1229 = vmatpush1.msra.mxu0 %v792
    %1230 = vmatprep.subr.mxu0 %v801
    %1231 = vmatpush1.msra.mxu0 %v800
    %1232 = vmatprep.subr.mxu0 %v809
    %1233 = vmatpush1.msra.mxu0 %v808
    %1234 = vmatprep.subr.mxu0 %v817
    %1235 = vmatpush1.msra.mxu0 %v816
    %1236 = vmatprep.subr.mxu0 %v825
    %1237 = vmatpush1.msra.mxu0 %v824
    %1238 = vmatprep.subr.mxu0 %v833
    %1239 = vmatpush1.msra.mxu0 %v832
    %1240 = vmatprep.subr.mxu0 %v841
    %1241 = vmatpush1.msra.mxu0 %v840
    %1242 = vmatprep.subr.mxu0 %v849
    %1243 = vmatpush1.msra.mxu0 %v848
    %1244 = vmatprep.mubr.f32.mxu0 %v962
    %1245 = vmatmul.mubr.f32.gmra.mrb[0].mxu0 %v955
    %v1246 = vpop.f32.mrb[0].mxu0
    %v1247 = vadd.f32 %v1176, %v1246
    %v1248 = vpop.f32.mrb[0].mxu0
    %v1249 = vadd.f32 %v1178, %v1248
    %1250 = vdwg.mxu0
    %1251 = vmatprep.subr.mxu0 %v347
    %1252 = vmatpush1.msra.mxu0 %v346
    %1253 = vmatprep.subr.mxu0 %v355
    %1254 = vmatpush1.msra.mxu0 %v354
    %1255 = vmatprep.subr.mxu0 %v363
    %1256 = vmatpush1.msra.mxu0 %v362
    %1257 = vmatprep.subr.mxu0 %v371
    %1258 = vmatpush1.msra.mxu0 %v370
    %1259 = vmatprep.subr.mxu0 %v379
    %1260 = vmatpush1.msra.mxu0 %v378
    %1261 = vmatprep.subr.mxu0 %v387
    %1262 = vmatpush1.msra.mxu0 %v386
    %1263 = vmatprep.subr.mxu0 %v395
    %1264 = vmatpush1.msra.mxu0 %v394
    %1265 = vmatprep.subr.mxu0 %v403
    %1266 = vmatpush1.msra.mxu0 %v402
    %1267 = vmatprep.subr.mxu0 %v411
    %1268 = vmatpush1.msra.mxu0 %v410
    %1269 = vmatprep.subr.mxu0 %v419
    %1270 = vmatpush1.msra.mxu0 %v418
    %1271 = vmatprep.subr.mxu0 %v427
    %1272 = vmatpush1.msra.mxu0 %v426
    %1273 = vmatprep.subr.mxu0 %v435
    %1274 = vmatpush1.msra.mxu0 %v434
    %1275 = vmatprep.subr.mxu0 %v443
    %1276 = vmatpush1.msra.mxu0 %v442
    %1277 = vmatprep.subr.mxu0 %v451
    %1278 = vmatpush1.msra.mxu0 %v450
    %1279 = vmatprep.subr.mxu0 %v459
    %1280 = vmatpush1.msra.mxu0 %v458
    %1281 = vmatprep.subr.mxu0 %v467
    %1282 = vmatpush1.msra.mxu0 %v466
    %1283 = vmatprep.subr.mxu0 %v475
    %1284 = vmatpush1.msra.mxu0 %v474
    %1285 = vmatprep.subr.mxu0 %v483
    %1286 = vmatpush1.msra.mxu0 %v482
    %1287 = vmatprep.subr.mxu0 %v491
    %1288 = vmatpush1.msra.mxu0 %v490
    %1289 = vmatprep.subr.mxu0 %v499
    %1290 = vmatpush1.msra.mxu0 %v498
    %1291 = vmatprep.subr.mxu0 %v507
    %1292 = vmatpush1.msra.mxu0 %v506
    %1293 = vmatprep.subr.mxu0 %v515
    %1294 = vmatpush1.msra.mxu0 %v514
    %1295 = vmatprep.subr.mxu0 %v523
    %1296 = vmatpush1.msra.mxu0 %v522
    %1297 = vmatprep.subr.mxu0 %v531
    %1298 = vmatpush1.msra.mxu0 %v530
    %1299 = vmatprep.subr.mxu0 %v539
    %1300 = vmatpush1.msra.mxu0 %v538
    %1301 = vmatprep.subr.mxu0 %v547
    %1302 = vmatpush1.msra.mxu0 %v546
    %1303 = vmatprep.subr.mxu0 %v555
    %1304 = vmatpush1.msra.mxu0 %v554
    %1305 = vmatprep.subr.mxu0 %v563
    %1306 = vmatpush1.msra.mxu0 %v562
    %1307 = vmatprep.subr.mxu0 %v571
    %1308 = vmatpush1.msra.mxu0 %v570
    %1309 = vmatprep.subr.mxu0 %v579
    %1310 = vmatpush1.msra.mxu0 %v578
    %1311 = vmatprep.subr.mxu0 %v587
    %1312 = vmatpush1.msra.mxu0 %v586
    %1313 = vmatprep.subr.mxu0 %v595
    %1314 = vmatpush1.msra.mxu0 %v594
    %1315 = vmatprep.mubr.f32.mxu0 %v948
    %1316 = vmatmul.mubr.f32.gmra.mrb[0].mxu0 %v941
    %v1317 = vpop.f32.mrb[0].mxu0
    %v1318 = vadd.f32 %v875, %v1317
    %v1319 = vpop.f32.mrb[0].mxu0
    %v1320 = vadd.f32 %v879, %v1319
    %1321 = vdwg.mxu0
    %1322 = vmatprep.subr.mxu0 %v603
    %1323 = vmatpush1.msra.mxu0 %v602
    %1324 = vmatprep.subr.mxu0 %v611
    %1325 = vmatpush1.msra.mxu0 %v610
    %1326 = vmatprep.subr.mxu0 %v619
    %1327 = vmatpush1.msra.mxu0 %v618
    %1328 = vmatprep.subr.mxu0 %v627
    %1329 = vmatpush1.msra.mxu0 %v626
    %1330 = vmatprep.subr.mxu0 %v635
    %1331 = vmatpush1.msra.mxu0 %v634
    %1332 = vmatprep.subr.mxu0 %v643
    %1333 = vmatpush1.msra.mxu0 %v642
    %1334 = vmatprep.subr.mxu0 %v651
    %1335 = vmatpush1.msra.mxu0 %v650
    %1336 = vmatprep.subr.mxu0 %v659
    %1337 = vmatpush1.msra.mxu0 %v658
    %1338 = vmatprep.subr.mxu0 %v667
    %1339 = vmatpush1.msra.mxu0 %v666
    %1340 = vmatprep.subr.mxu0 %v675
    %1341 = vmatpush1.msra.mxu0 %v674
    %1342 = vmatprep.subr.mxu0 %v683
    %1343 = vmatpush1.msra.mxu0 %v682
    %1344 = vmatprep.subr.mxu0 %v691
    %1345 = vmatpush1.msra.mxu0 %v690
    %1346 = vmatprep.subr.mxu0 %v699
    %1347 = vmatpush1.msra.mxu0 %v698
    %1348 = vmatprep.subr.mxu0 %v707
    %1349 = vmatpush1.msra.mxu0 %v706
    %1350 = vmatprep.subr.mxu0 %v715
    %1351 = vmatpush1.msra.mxu0 %v714
    %1352 = vmatprep.subr.mxu0 %v723
    %1353 = vmatpush1.msra.mxu0 %v722
    %1354 = vmatprep.subr.mxu0 %v731
    %1355 = vmatpush1.msra.mxu0 %v730
    %1356 = vmatprep.subr.mxu0 %v739
    %1357 = vmatpush1.msra.mxu0 %v738
    %1358 = vmatprep.subr.mxu0 %v747
    %1359 = vmatpush1.msra.mxu0 %v746
    %1360 = vmatprep.subr.mxu0 %v755
    %1361 = vmatpush1.msra.mxu0 %v754
    %1362 = vmatprep.subr.mxu0 %v763
    %1363 = vmatpush1.msra.mxu0 %v762
    %1364 = vmatprep.subr.mxu0 %v771
    %1365 = vmatpush1.msra.mxu0 %v770
    %1366 = vmatprep.subr.mxu0 %v779
    %1367 = vmatpush1.msra.mxu0 %v778
    %1368 = vmatprep.subr.mxu0 %v787
    %1369 = vmatpush1.msra.mxu0 %v786
    %1370 = vmatprep.subr.mxu0 %v795
    %1371 = vmatpush1.msra.mxu0 %v794
    %1372 = vmatprep.subr.mxu0 %v803
    %1373 = vmatpush1.msra.mxu0 %v802
    %1374 = vmatprep.subr.mxu0 %v811
    %1375 = vmatpush1.msra.mxu0 %v810
    %1376 = vmatprep.subr.mxu0 %v819
    %1377 = vmatpush1.msra.mxu0 %v818
    %1378 = vmatprep.subr.mxu0 %v827
    %1379 = vmatpush1.msra.mxu0 %v826
    %1380 = vmatprep.subr.mxu0 %v835
    %1381 = vmatpush1.msra.mxu0 %v834
    %1382 = vmatprep.subr.mxu0 %v843
    %1383 = vmatpush1.msra.mxu0 %v842
    %1384 = vmatprep.subr.mxu0 %v851
    %1385 = vmatpush1.msra.mxu0 %v850
    %1386 = vmatprep.mubr.f32.mxu0 %v962
    %1387 = vmatmul.mubr.f32.gmra.mrb[0].mxu0 %v955
    %v1388 = vpop.f32.mrb[0].mxu0
    %v1389 = vadd.f32 %v1318, %v1388
    %v1390 = vpop.f32.mrb[0].mxu0
    %v1391 = vadd.f32 %v1320, %v1390
    %1392 = vdwg.mxu0
    %1393 = vmatprep.subr.mxu0 %v349
    %1394 = vmatpush1.msra.mxu0 %v348
    %1395 = vmatprep.subr.mxu0 %v357
    %1396 = vmatpush1.msra.mxu0 %v356
    %1397 = vmatprep.subr.mxu0 %v365
    %1398 = vmatpush1.msra.mxu0 %v364
    %1399 = vmatprep.subr.mxu0 %v373
    %1400 = vmatpush1.msra.mxu0 %v372
    %1401 = vmatprep.subr.mxu0 %v381
    %1402 = vmatpush1.msra.mxu0 %v380
    %1403 = vmatprep.subr.mxu0 %v389
    %1404 = vmatpush1.msra.mxu0 %v388
    %1405 = vmatprep.subr.mxu0 %v397
    %1406 = vmatpush1.msra.mxu0 %v396
    %1407 = vmatprep.subr.mxu0 %v405
    %1408 = vmatpush1.msra.mxu0 %v404
    %1409 = vmatprep.subr.mxu0 %v413
    %1410 = vmatpush1.msra.mxu0 %v412
    %1411 = vmatprep.subr.mxu0 %v421
    %1412 = vmatpush1.msra.mxu0 %v420
    %1413 = vmatprep.subr.mxu0 %v429
    %1414 = vmatpush1.msra.mxu0 %v428
    %1415 = vmatprep.subr.mxu0 %v437
    %1416 = vmatpush1.msra.mxu0 %v436
    %1417 = vmatprep.subr.mxu0 %v445
    %1418 = vmatpush1.msra.mxu0 %v444
    %1419 = vmatprep.subr.mxu0 %v453
    %1420 = vmatpush1.msra.mxu0 %v452
    %1421 = vmatprep.subr.mxu0 %v461
    %1422 = vmatpush1.msra.mxu0 %v460
    %1423 = vmatprep.subr.mxu0 %v469
    %1424 = vmatpush1.msra.mxu0 %v468
    %1425 = vmatprep.subr.mxu0 %v477
    %1426 = vmatpush1.msra.mxu0 %v476
    %1427 = vmatprep.subr.mxu0 %v485
    %1428 = vmatpush1.msra.mxu0 %v484
    %1429 = vmatprep.subr.mxu0 %v493
    %1430 = vmatpush1.msra.mxu0 %v492
    %1431 = vmatprep.subr.mxu0 %v501
    %1432 = vmatpush1.msra.mxu0 %v500
    %1433 = vmatprep.subr.mxu0 %v509
    %1434 = vmatpush1.msra.mxu0 %v508
    %1435 = vmatprep.subr.mxu0 %v517
    %1436 = vmatpush1.msra.mxu0 %v516
    %1437 = vmatprep.subr.mxu0 %v525
    %1438 = vmatpush1.msra.mxu0 %v524
    %1439 = vmatprep.subr.mxu0 %v533
    %1440 = vmatpush1.msra.mxu0 %v532
    %1441 = vmatprep.subr.mxu0 %v541
    %1442 = vmatpush1.msra.mxu0 %v540
    %1443 = vmatprep.subr.mxu0 %v549
    %1444 = vmatpush1.msra.mxu0 %v548
    %1445 = vmatprep.subr.mxu0 %v557
    %1446 = vmatpush1.msra.mxu0 %v556
    %1447 = vmatprep.subr.mxu0 %v565
    %1448 = vmatpush1.msra.mxu0 %v564
    %1449 = vmatprep.subr.mxu0 %v573
    %1450 = vmatpush1.msra.mxu0 %v572
    %1451 = vmatprep.subr.mxu0 %v581
    %1452 = vmatpush1.msra.mxu0 %v580
    %1453 = vmatprep.subr.mxu0 %v589
    %1454 = vmatpush1.msra.mxu0 %v588
    %1455 = vmatprep.subr.mxu0 %v597
    %1456 = vmatpush1.msra.mxu0 %v596
    %1457 = vmatprep.mubr.f32.mxu0 %v948
    %1458 = vmatmul.mubr.f32.gmra.mrb[0].mxu0 %v941
    %v1459 = vpop.f32.mrb[0].mxu0
    %v1460 = vadd.f32 %v883, %v1459
    %v1461 = vpop.f32.mrb[0].mxu0
    %v1462 = vadd.f32 %v887, %v1461
    %1463 = vdwg.mxu0
    %1464 = vmatprep.subr.mxu0 %v605
    %1465 = vmatpush1.msra.mxu0 %v604
    %1466 = vmatprep.subr.mxu0 %v613
    %1467 = vmatpush1.msra.mxu0 %v612
    %1468 = vmatprep.subr.mxu0 %v621
    %1469 = vmatpush1.msra.mxu0 %v620
    %1470 = vmatprep.subr.mxu0 %v629
    %1471 = vmatpush1.msra.mxu0 %v628
    %1472 = vmatprep.subr.mxu0 %v637
    %1473 = vmatpush1.msra.mxu0 %v636
    %1474 = vmatprep.subr.mxu0 %v645
    %1475 = vmatpush1.msra.mxu0 %v644
    %1476 = vmatprep.subr.mxu0 %v653
    %1477 = vmatpush1.msra.mxu0 %v652
    %1478 = vmatprep.subr.mxu0 %v661
    %1479 = vmatpush1.msra.mxu0 %v660
    %1480 = vmatprep.subr.mxu0 %v669
    %1481 = vmatpush1.msra.mxu0 %v668
    %1482 = vmatprep.subr.mxu0 %v677
    %1483 = vmatpush1.msra.mxu0 %v676
    %1484 = vmatprep.subr.mxu0 %v685
    %1485 = vmatpush1.msra.mxu0 %v684
    %1486 = vmatprep.subr.mxu0 %v693
    %1487 = vmatpush1.msra.mxu0 %v692
    %1488 = vmatprep.subr.mxu0 %v701
    %1489 = vmatpush1.msra.mxu0 %v700
    %1490 = vmatprep.subr.mxu0 %v709
    %1491 = vmatpush1.msra.mxu0 %v708
    %1492 = vmatprep.subr.mxu0 %v717
    %1493 = vmatpush1.msra.mxu0 %v716
    %1494 = vmatprep.subr.mxu0 %v725
    %1495 = vmatpush1.msra.mxu0 %v724
    %1496 = vmatprep.subr.mxu0 %v733
    %1497 = vmatpush1.msra.mxu0 %v732
    %1498 = vmatprep.subr.mxu0 %v741
    %1499 = vmatpush1.msra.mxu0 %v740
    %1500 = vmatprep.subr.mxu0 %v749
    %1501 = vmatpush1.msra.mxu0 %v748
    %1502 = vmatprep.subr.mxu0 %v757
    %1503 = vmatpush1.msra.mxu0 %v756
    %1504 = vmatprep.subr.mxu0 %v765
    %1505 = vmatpush1.msra.mxu0 %v764
    %1506 = vmatprep.subr.mxu0 %v773
    %1507 = vmatpush1.msra.mxu0 %v772
    %1508 = vmatprep.subr.mxu0 %v781
    %1509 = vmatpush1.msra.mxu0 %v780
    %1510 = vmatprep.subr.mxu0 %v789
    %1511 = vmatpush1.msra.mxu0 %v788
    %1512 = vmatprep.subr.mxu0 %v797
    %1513 = vmatpush1.msra.mxu0 %v796
    %1514 = vmatprep.subr.mxu0 %v805
    %1515 = vmatpush1.msra.mxu0 %v804
    %1516 = vmatprep.subr.mxu0 %v813
    %1517 = vmatpush1.msra.mxu0 %v812
    %1518 = vmatprep.subr.mxu0 %v821
    %1519 = vmatpush1.msra.mxu0 %v820
    %1520 = vmatprep.subr.mxu0 %v829
    %1521 = vmatpush1.msra.mxu0 %v828
    %1522 = vmatprep.subr.mxu0 %v837
    %1523 = vmatpush1.msra.mxu0 %v836
    %1524 = vmatprep.subr.mxu0 %v845
    %1525 = vmatpush1.msra.mxu0 %v844
    %1526 = vmatprep.subr.mxu0 %v853
    %1527 = vmatpush1.msra.mxu0 %v852
    %1528 = vmatprep.mubr.f32.mxu0 %v962
    %1529 = vmatmul.mubr.f32.gmra.mrb[0].mxu0 %v955
    %v1530 = vpop.f32.mrb[0].mxu0
    %v1531 = vadd.f32 %v1460, %v1530
    %v1532 = vpop.f32.mrb[0].mxu0
    %v1533 = vadd.f32 %v1462, %v1532
    %1534 = vdwg.mxu0
    %v1543 = vcombine.low %v1105, %v1107
    %v1544 = vcombine.high %v1105, %v1107
    %v1545 = vcombine.low %v1247, %v1249
    %v1546 = vcombine.high %v1247, %v1249
    %v1548 = vunpack.c.l.s4 1983009808
    %v1549 = vunpack.c.0.s8 %v1548
    %v1550 = vlaneseq
    %v1551 = vshrl.u32 %v1550, 7
    %v1552 = vsub.s32 %v1549, %v1551
    %v1553 = vrot.slane %v1543, %v1552
    %v1555 = vunpack.c.l.s4 1983009808
    %v1556 = vunpack.c.0.s8 %v1555
    %v1557 = vlaneseq
    %v1558 = vshrl.u32 %v1557, 7
    %v1559 = vsub.s32 %v1556, %v1558
    %v1560 = vrot.slane %v1544, %v1559
    %v1562 = vunpack.c.l.s4 1983009808
    %v1563 = vunpack.c.0.s8 %v1562
    %v1564 = vlaneseq
    %v1565 = vshrl.u32 %v1564, 7
    %v1566 = vsub.s32 %v1563, %v1565
    %v1567 = vrot.slane %v1545, %v1566
    %v1569 = vunpack.c.l.s4 1983009808
    %v1570 = vunpack.c.0.s8 %v1569
    %v1571 = vlaneseq
    %v1572 = vshrl.u32 %v1571, 7
    %v1573 = vsub.s32 %v1570, %v1572
    %v1574 = vrot.slane %v1546, %v1573
    %v1575 = vcombine.low %v1553, %v1567
    %v1576 = vcombine.high %v1553, %v1567
    %v1577 = vcombine.low %v1560, %v1574
    %v1578 = vcombine.high %v1560, %v1574
    %v1579 = vcombine.low %v1389, %v1391
    %v1580 = vcombine.high %v1389, %v1391
    %v1581 = vcombine.low %v1531, %v1533
    %v1582 = vcombine.high %v1531, %v1533
    %v1584 = vunpack.c.l.s4 1983009808
    %v1585 = vunpack.c.0.s8 %v1584
    %v1586 = vlaneseq
    %v1587 = vshrl.u32 %v1586, 7
    %v1588 = vsub.s32 %v1585, %v1587
    %v1589 = vrot.slane %v1579, %v1588
    %v1591 = vunpack.c.l.s4 1983009808
    %v1592 = vunpack.c.0.s8 %v1591
    %v1593 = vlaneseq
    %v1594 = vshrl.u32 %v1593, 7
    %v1595 = vsub.s32 %v1592, %v1594
    %v1596 = vrot.slane %v1580, %v1595
    %v1598 = vunpack.c.l.s4 1983009808
    %v1599 = vunpack.c.0.s8 %v1598
    %v1600 = vlaneseq
    %v1601 = vshrl.u32 %v1600, 7
    %v1602 = vsub.s32 %v1599, %v1601
    %v1603 = vrot.slane %v1581, %v1602
    %v1605 = vunpack.c.l.s4 1983009808
    %v1606 = vunpack.c.0.s8 %v1605
    %v1607 = vlaneseq
    %v1608 = vshrl.u32 %v1607, 7
    %v1609 = vsub.s32 %v1606, %v1608
    %v1610 = vrot.slane %v1582, %v1609
    %v1611 = vcombine.low %v1589, %v1603
    %v1612 = vcombine.high %v1589, %v1603
    %v1613 = vcombine.low %v1596, %v1610
    %v1614 = vcombine.high %v1596, %v1610
    %1623 = vst [vmem:[#allocation8] sm:$0xff] %v1575
    %1624 = vst [vmem:[#allocation8 + $0x8] sm:$0xff] %v1611
    %1625 = vst [vmem:[#allocation8 + $0x10] sm:$0xff] %v1576
    %1626 = vst [vmem:[#allocation8 + $0x18] sm:$0xff] %v1612
    %1627 = vst [vmem:[#allocation8 + $0x20] sm:$0xff] %v1577
    %1628 = vst [vmem:[#allocation8 + $0x28] sm:$0xff] %v1613
    %1629 = vst [vmem:[#allocation8 + $0x30] sm:$0xff] %v1578
    %1630 = vst [vmem:[#allocation8 + $0x38] sm:$0xff] %v1614
    // Predicated region
    $region26: #{tpu_custom_call.1} parent=1 // pred_check
      _
    $region27: #{tpu_custom_call.1} parent=1 // pred_check_branch
      %1632 = sbr.rel (0) target = $region29
    $region28: #{tpu_custom_call.1} parent=1 // pred_region
      %s1634 = ssub.s32 1024, 256
      %1635 = vsyncadd [#allocation4], %s1634
      %s1636 = sshll.u32 [#allocation8], 4
      %s1637 = int_to_ptr.vmem [resolvable:$true] %s1636
      %1642 = dma.vmem_to_hbm [thread:$0]  %s1637, 256, %s3, [#allocation4], 256, 256, 16
    $region29: #{tpu_custom_call.1} parent=1 // pred_fallthru
      _
    // Predicated region
    $region30: #{tpu_custom_call.1} parent=1 // pred_check
      _
    $region31: #{tpu_custom_call.1} parent=1 // pred_check_branch
      %1644 = sbr.rel (0) target = $region33
    $region32: #{tpu_custom_call.1} parent=1 // pred_region
      %1645 = dma.done [#allocation4], 1024
    $region33: #{tpu_custom_call.1} parent=1 // pred_fallthru
      _
    %1646 = vsyncpa [#allocation3], 1
    %1647 = vsyncpa [#allocation6], 1
    %1648 = vsyncpa [#allocation4], 1

</llo_original>
